<compile_context>
chip_gen: v7x
topology: tpu7x:2x2x1
jax: 0.10.0
libtpu: 0.0.40
codegen_flags: <defaults>
</compile_context>

<pallas_src>
import functools

import jax
import jax.numpy as jnp
from jax.experimental import pallas as pl
from jax.experimental.pallas import tpu as pltpu


def _mlp_kernel(x_ref, w_in_ref, b_in_ref, w_h_ref, b_h_ref,
                w_out_ref, b_out_ref, o_ref, *, layers):
    # x_ref:  (1, tm)                 batch on lanes
    # w_in:   (H, 1)   b_in:  (H, 1)
    # w_h:    (H, H)   b_h:   (H, 1)
    # w_out:  (2, H)   b_out: (2, 1)
    # o_ref:  (2, tm)                 lane-dense output slab
    x = x_ref[...]                                        # (1, tm)

    # Input Linear(1, H): rank-1 outer product -> pure VPU broadcast FMA.
    h = w_in_ref[...] * x + b_in_ref[...]                 # (H, tm)

    # The PyTorch Sequential reuses the SAME fca module `layers` times,
    # so identical (w_h, b_h) are applied at every hidden layer.
    # (layers is tiny here; for deep configs switch to lax.fori_loop(unroll=True).)
    for _ in range(layers):
        h = jnp.sin(jnp.dot(w_h_ref[...], h,
                            preferred_element_type=jnp.float32)
                    + b_h_ref[...])                       # (H, tm)

    out = jnp.dot(w_out_ref[...], h,
                  preferred_element_type=jnp.float32) + b_out_ref[...]  # (2, tm)
    o_ref[...] = out.astype(o_ref.dtype)


def odenet_forward(x, params, *, layers, tm=512):
    """x: (N, 1) float32.  Returns (x_N, px_N), each (N, 1)."""
    w_in, b_in, w_h, b_h, w_out, b_out = params           # torch [out, in] order
    N = x.shape[0]
    H = w_h.shape[0]

    tm = min(tm, N)
    assert N % tm == 0, "batch must be a multiple of the row tile"
    assert tm % 128 == 0 or tm == N, "tile must be lane-aligned (mult of 128) or full N"

    x_row = x.reshape(1, N)                               # batch on lanes
    grid = (N // tm,)
    full = lambda i: (0, 0)                               # whole-array parameter blocks

    # Advisory cost hint for XLA scheduling around the custom call.
    flops = N * (2 * H + layers * (2 * H * H + 2 * H) + 2 * 2 * H + 2)
    cost = pl.CostEstimate(
        flops=flops,
        transcendentals=N * H * layers,
        bytes_accessed=4 * (N + 2 * N + H + H + H * H + H + 2 * H + 2),
    )

    out = pl.pallas_call(
        functools.partial(_mlp_kernel, layers=layers),
        out_shape=jax.ShapeDtypeStruct((2, N), jnp.float32),
        grid_spec=pltpu.PrefetchScalarGridSpec(
            num_scalar_prefetch=0,
            grid=grid,
            in_specs=[
                pl.BlockSpec((1, tm), lambda i: (0, i)),   # t tile (lane-dense)
                pl.BlockSpec((H, 1), full),                # w_in
                pl.BlockSpec((H, 1), full),                # b_in
                pl.BlockSpec((H, H), full),                # w_h (shared)
                pl.BlockSpec((H, 1), full),                # b_h (shared)
                pl.BlockSpec((2, H), full),                # w_out
                pl.BlockSpec((2, 1), full),                # b_out
            ],
            out_specs=pl.BlockSpec((2, tm), lambda i: (0, i)),  # lane-dense output
        ),
        compiler_params=pltpu.CompilerParams(
            dimension_semantics=("parallel",),             # shards across v7x's 2 TCs
            vmem_limit_bytes=32 * 1024 * 1024,
        ),
        cost_estimate=cost,
    )(x_row, w_in, b_in, w_h, b_h, w_out, b_out)

    x_N = out[0, :].reshape(-1, 1)
    px_N = out[1, :].reshape(-1, 1)
    return x_N, px_N


def init_params(key, hidden):
    """Deterministic synthetic parameters in PyTorch [out, in] order."""
    ks = jax.random.split(key, 6)
    w_in = jax.random.normal(ks[0], (hidden, 1), jnp.float32) * 0.5
    b_in = jax.random.normal(ks[1], (hidden, 1), jnp.float32) * 0.1
    w_h = jax.random.normal(ks[2], (hidden, hidden), jnp.float32) * (1.0 / hidden ** 0.5)
    b_h = jax.random.normal(ks[3], (hidden, 1), jnp.float32) * 0.1
    w_out = jax.random.normal(ks[4], (2, hidden), jnp.float32) * (1.0 / hidden ** 0.5)
    b_out = jax.random.normal(ks[5], (2, 1), jnp.float32) * 0.1
    return (w_in, b_in, w_h, b_h, w_out, b_out)


def reference_forward(x, params, *, layers):
    """Pure-JAX reference of the torch module's forward (x: (N,1))."""
    w_in, b_in, w_h, b_h, w_out, b_out = params
    h = x @ w_in.T + b_in.T                                # (N, H)
    for _ in range(layers):
        h = jnp.sin(h @ w_h.T + b_h.T)
    out = h @ w_out.T + b_out.T                            # (N, 2)
    return out[:, 0].reshape(-1, 1), out[:, 1].reshape(-1, 1)


if __name__ == "__main__":
    hidden = 32
    layers = 2
    N = 512          # batch of time points; tm=256 -> 2 grid steps (multi-step grid)

    key = jax.random.PRNGKey(0)
    k_x, k_p = jax.random.split(key)
    t = jax.random.uniform(k_x, (N, 1), jnp.float32, minval=0.0, maxval=4.0)
    params = init_params(k_p, hidden)

    x_N, px_N = odenet_forward(t, params, layers=layers, tm=256)
    jax.block_until_ready((x_N, px_N))

    # correctness check against pure-JAX reference
    x_ref, px_ref = reference_forward(t, params, layers=layers)
    assert x_N.shape == (N, 1) and px_N.shape == (N, 1)
    assert jnp.allclose(x_N, x_ref, atol=1e-5, rtol=1e-5)
    assert jnp.allclose(px_N, px_ref, atol=1e-5, rtol=1e-5)

    print("KERNEL_OK")
</pallas_src>

<mosaic_0001>
module attributes {stable_mosaic.version = 11 : i64} {
  func.func @_mlp_kernel(%arg0: i32, %arg1: memref<1x256xf32, #tpu.memory_space<vmem>>, %arg2: memref<32x1xf32, #tpu.memory_space<vmem>>, %arg3: memref<32x1xf32, #tpu.memory_space<vmem>>, %arg4: memref<32x32xf32, #tpu.memory_space<vmem>>, %arg5: memref<32x1xf32, #tpu.memory_space<vmem>>, %arg6: memref<2x32xf32, #tpu.memory_space<vmem>>, %arg7: memref<2x1xf32, #tpu.memory_space<vmem>>, %arg8: memref<2x256xf32, #tpu.memory_space<vmem>>) attributes {dimension_semantics = [#tpu.dimension_semantics<parallel>], iteration_bounds = array<i64: 2>, scalar_prefetch = 0 : i64, scratch_operands = 0 : i64, tpu.core_type = #tpu.core_type<tc>, window_params = [{transform_indices = @transform_0, window_bounds = array<i64: 1, 256>}, {pipeline_mode = #tpu.pipeline_mode<synchronous>, transform_indices = @transform_1, window_bounds = array<i64: 32, 1>}, {pipeline_mode = #tpu.pipeline_mode<synchronous>, transform_indices = @transform_2, window_bounds = array<i64: 32, 1>}, {pipeline_mode = #tpu.pipeline_mode<synchronous>, transform_indices = @transform_3, window_bounds = array<i64: 32, 32>}, {pipeline_mode = #tpu.pipeline_mode<synchronous>, transform_indices = @transform_4, window_bounds = array<i64: 32, 1>}, {pipeline_mode = #tpu.pipeline_mode<synchronous>, transform_indices = @transform_5, window_bounds = array<i64: 2, 32>}, {pipeline_mode = #tpu.pipeline_mode<synchronous>, transform_indices = @transform_6, window_bounds = array<i64: 2, 1>}, {transform_indices = @transform_7, window_bounds = array<i64: 2, 256>}]} {
    %c0 = arith.constant 0 : index
    %c0_0 = arith.constant 0 : index
    %0 = vector.load %arg1[%c0, %c0_0] : memref<1x256xf32, #tpu.memory_space<vmem>>, vector<1x256xf32>
    %c0_1 = arith.constant 0 : index
    %c0_2 = arith.constant 0 : index
    %1 = vector.load %arg2[%c0_1, %c0_2] : memref<32x1xf32, #tpu.memory_space<vmem>>, vector<32x1xf32>
    %2 = vector.broadcast %1 : vector<32x1xf32> to vector<32x256xf32>
    %3 = vector.broadcast %0 : vector<1x256xf32> to vector<32x256xf32>
    %4 = arith.mulf %2, %3 : vector<32x256xf32>
    %c0_3 = arith.constant 0 : index
    %c0_4 = arith.constant 0 : index
    %5 = vector.load %arg3[%c0_3, %c0_4] : memref<32x1xf32, #tpu.memory_space<vmem>>, vector<32x1xf32>
    %6 = vector.broadcast %5 : vector<32x1xf32> to vector<32x256xf32>
    %7 = arith.addf %4, %6 : vector<32x256xf32>
    %c0_5 = arith.constant 0 : index
    %c0_6 = arith.constant 0 : index
    %8 = vector.load %arg4[%c0_5, %c0_6] : memref<32x32xf32, #tpu.memory_space<vmem>>, vector<32x32xf32>
    %cst = arith.constant dense<0.000000e+00> : vector<32x256xf32>
    %9 = tpu.matmul %8, %7, %cst {dimension_numbers = #tpu.dot_dimension_numbers<[1], [0], [0], [1], [0, 0, 1, 1], [], []>} : vector<32x32xf32>, vector<32x256xf32>, vector<32x256xf32> -> vector<32x256xf32>
    %c0_7 = arith.constant 0 : index
    %c0_8 = arith.constant 0 : index
    %10 = vector.load %arg5[%c0_7, %c0_8] : memref<32x1xf32, #tpu.memory_space<vmem>>, vector<32x1xf32>
    %11 = vector.broadcast %10 : vector<32x1xf32> to vector<32x256xf32>
    %12 = arith.addf %9, %11 : vector<32x256xf32>
    %13 = math.sin %12 : vector<32x256xf32>
    %c0_9 = arith.constant 0 : index
    %c0_10 = arith.constant 0 : index
    %14 = vector.load %arg4[%c0_9, %c0_10] : memref<32x32xf32, #tpu.memory_space<vmem>>, vector<32x32xf32>
    %cst_11 = arith.constant dense<0.000000e+00> : vector<32x256xf32>
    %15 = tpu.matmul %14, %13, %cst_11 {dimension_numbers = #tpu.dot_dimension_numbers<[1], [0], [0], [1], [0, 0, 1, 1], [], []>} : vector<32x32xf32>, vector<32x256xf32>, vector<32x256xf32> -> vector<32x256xf32>
    %c0_12 = arith.constant 0 : index
    %c0_13 = arith.constant 0 : index
    %16 = vector.load %arg5[%c0_12, %c0_13] : memref<32x1xf32, #tpu.memory_space<vmem>>, vector<32x1xf32>
    %17 = vector.broadcast %16 : vector<32x1xf32> to vector<32x256xf32>
    %18 = arith.addf %15, %17 : vector<32x256xf32>
    %19 = math.sin %18 : vector<32x256xf32>
    %c0_14 = arith.constant 0 : index
    %c0_15 = arith.constant 0 : index
    %20 = vector.load %arg6[%c0_14, %c0_15] : memref<2x32xf32, #tpu.memory_space<vmem>>, vector<2x32xf32>
    %cst_16 = arith.constant dense<0.000000e+00> : vector<2x256xf32>
    %21 = tpu.matmul %20, %19, %cst_16 {dimension_numbers = #tpu.dot_dimension_numbers<[1], [0], [0], [1], [0, 0, 1, 1], [], []>} : vector<2x32xf32>, vector<32x256xf32>, vector<2x256xf32> -> vector<2x256xf32>
    %c0_17 = arith.constant 0 : index
    %c0_18 = arith.constant 0 : index
    %22 = vector.load %arg7[%c0_17, %c0_18] : memref<2x1xf32, #tpu.memory_space<vmem>>, vector<2x1xf32>
    %23 = vector.broadcast %22 : vector<2x1xf32> to vector<2x256xf32>
    %24 = arith.addf %21, %23 : vector<2x256xf32>
    %c0_19 = arith.constant 0 : index
    %c0_20 = arith.constant 0 : index
    %25 = vector.load %arg8[%c0_19, %c0_20] : memref<2x256xf32, #tpu.memory_space<vmem>>, vector<2x256xf32>
    tpu.vector_store %arg8[%c0_19, %c0_20], %24 {strides = array<i32>} : memref<2x256xf32, #tpu.memory_space<vmem>>, vector<2x256xf32>,
    return
  }
  func.func @transform_0(%arg0: i32) -> (i32, i32) {
    %c0_i32 = arith.constant 0 : i32
    %c0_i32_0 = arith.constant 0 : i32
    return %c0_i32, %arg0 : i32, i32
  }
  func.func @transform_1(%arg0: i32) -> (i32, i32) {
    %c0_i32 = arith.constant 0 : i32
    %c0_i32_0 = arith.constant 0 : i32
    %c0_i32_1 = arith.constant 0 : i32
    return %c0_i32, %c0_i32_0 : i32, i32
  }
  func.func @transform_2(%arg0: i32) -> (i32, i32) {
    %c0_i32 = arith.constant 0 : i32
    %c0_i32_0 = arith.constant 0 : i32
    %c0_i32_1 = arith.constant 0 : i32
    return %c0_i32, %c0_i32_0 : i32, i32
  }
  func.func @transform_3(%arg0: i32) -> (i32, i32) {
    %c0_i32 = arith.constant 0 : i32
    %c0_i32_0 = arith.constant 0 : i32
    %c0_i32_1 = arith.constant 0 : i32
    return %c0_i32, %c0_i32_0 : i32, i32
  }
  func.func @transform_4(%arg0: i32) -> (i32, i32) {
    %c0_i32 = arith.constant 0 : i32
    %c0_i32_0 = arith.constant 0 : i32
    %c0_i32_1 = arith.constant 0 : i32
    return %c0_i32, %c0_i32_0 : i32, i32
  }
  func.func @transform_5(%arg0: i32) -> (i32, i32) {
    %c0_i32 = arith.constant 0 : i32
    %c0_i32_0 = arith.constant 0 : i32
    %c0_i32_1 = arith.constant 0 : i32
    return %c0_i32, %c0_i32_0 : i32, i32
  }
  func.func @transform_6(%arg0: i32) -> (i32, i32) {
    %c0_i32 = arith.constant 0 : i32
    %c0_i32_0 = arith.constant 0 : i32
    %c0_i32_1 = arith.constant 0 : i32
    return %c0_i32, %c0_i32_0 : i32, i32
  }
  func.func @transform_7(%arg0: i32) -> (i32, i32) {
    %c0_i32 = arith.constant 0 : i32
    %c0_i32_0 = arith.constant 0 : i32
    return %c0_i32, %arg0 : i32, i32
  }
}

</mosaic_0001>

<llo_original>
// kernel: tpu_custom_call.1
$region0: #{tpu_custom_call.1}
  #allocation0 [shape = 'u32[]', space=smem, size = 0x4, offset = 0x4, fixed_abs, tag = 'smem constant byte address 0x4 - core index']
  #allocation1 [shape = 'u32[144,128]{1,0:T(1,128)}', space=vmem, size = 0x12000, scoped, tag = 'internal scratch']
  %s0 = inlined_call_operand.vmem [shape: f32[1,512], index: 0, kind: input, shape index: {}]
  %s1 = inlined_call_operand.vmem [shape: f32[32,1], index: 1, kind: input, shape index: {}]
  %s2 = inlined_call_operand.vmem [shape: f32[32,1], index: 2, kind: input, shape index: {}]
  %s3 = inlined_call_operand.vmem [shape: f32[32,32], index: 3, kind: input, shape index: {}]
  %s4 = inlined_call_operand.vmem [shape: f32[32,1], index: 4, kind: input, shape index: {}]
  %s5 = inlined_call_operand.vmem [shape: f32[2,32], index: 5, kind: input, shape index: {}]
  %s6 = inlined_call_operand.vmem [shape: f32[2,1], index: 6, kind: input, shape index: {}]
  %s7 = inlined_call_operand.hbm [shape: f32[2,512], index: 7, kind: output, shape index: {}]
  %s8 = sld [smem:[#allocation0]]
  $region61: #{tpu_custom_call.1} parent=0
    _
  %s10 = ssub.s32 1, %s8
  %s11 = scalar_select 0, %s10, %s8
  $region1: #{tpu_custom_call.1} parent=0
    #allocation2 [shape = 'u8[4096]{0}', space=vmem, size = 0x1000, scoped, tag = 'output window, operand 0']
    #allocation3 [shape = 's32[2]{0}', space=sflag, size = 0x8, scoped, tag = 'scoped memory for tpu_custom_call.1']
    %12 = vsyncpa [#allocation3], 0
    %s13 = scalar_lea.sflag [#allocation3], 1
    %14 = vsyncpa %s13, 0
    loop: start=0, step=1, limit=4
    $region2: #{tpu_custom_call.1} parent=1 // loop_pre_header
      _
    $region3: #{tpu_custom_call.1} parent=1 // loop_header
      %s16 = sphi 0, %s20
      %p17 = scmp.ge.s32.totalorder %s16, 4
      %s26 = sphi 0, %s28
      %s29 = sphi 0, %s26
      %s30 = sphi 0, %s29
      %s46 = sphi 0, %s30
      %s50 = sphi 0, %s50
      %s52 = sphi 0, %s50
      %s53 = sphi 0, %s52
      %s67 = sphi 0, %s53
      %s71 = sphi 0, %s71
      %s73 = sphi 0, %s71
      %s74 = sphi 0, %s73
      %s88 = sphi 0, %s74
      %s92 = sphi 0, %s92
      %s94 = sphi 0, %s92
      %s95 = sphi 0, %s94
      %s109 = sphi 0, %s95
      %s113 = sphi 0, %s113
      %s115 = sphi 0, %s113
      %s116 = sphi 0, %s115
      %s130 = sphi 0, %s116
      %s134 = sphi 0, %s134
      %s136 = sphi 0, %s134
      %s137 = sphi 0, %s136
      %s151 = sphi 0, %s137
      %s155 = sphi 0, %s155
      %s157 = sphi 0, %s155
      %s158 = sphi 0, %s157
      %s172 = sphi 0, %s158
      %s178 = sphi 0, %s180
      %s181 = sphi 0, %s178
      %s182 = sphi 0, %s181
      %s198 = sphi 0, %s182
    $region4: #{tpu_custom_call.1} parent=1 // loop_header_branch
      %19 = sbr.rel (%p17) target = $region8
    $region5: #{tpu_custom_call.1} parent=1 // loop_body
      %s21 = ssub.s32 %s16, 1
      %s22 = ssub.s32 %s16, 2
      %s23 = sadd.s32 %s16, 1
      %s24 = ssub.s32 %s16, %s23
      %p25 = scmp.eq.s32.totalorder %s24, 0
      %s27 = sadd.s32 %s26, 1
      %s28 = scalar_select %p25, %s26, %s27
      %p31 = pneg %p25
      %p32 = scmp.eq.s32.totalorder %s16, 1
      %p33 = por %p31, %p32
      %p34 = scmp.ne.s32.totalorder %s26, %s29
      %p35 = scmp.eq.s32.totalorder %s16, 0
      %p36 = por %p34, %p35
      %p37 = scmp.ne.s32.totalorder %s26, %s29
      %p38 = scmp.eq.s32.totalorder %s21, 1
      %p39 = por %p37, %p38
      %p40 = scmp.ne.s32.totalorder %s29, %s30
      %p41 = scmp.eq.s32.totalorder %s21, 0
      %p42 = por %p40, %p41
      %p43 = scmp.ne.s32.totalorder %s29, %s30
      %p44 = scmp.eq.s32.totalorder %s22, 1
      %p45 = por %p43, %p44
      %p47 = scmp.ne.s32.totalorder %s30, %s46
      %p48 = scmp.eq.s32.totalorder %s22, 0
      %p49 = por %p47, %p48
      %s51 = sadd.s32 %s50, 1
      %p54 = scmp.eq.s32.totalorder %s16, 1
      %p55 = scmp.ne.s32.totalorder %s50, %s52
      %p56 = scmp.eq.s32.totalorder %s16, 0
      %p57 = por %p55, %p56
      %p58 = scmp.ne.s32.totalorder %s50, %s52
      %p59 = scmp.eq.s32.totalorder %s21, 1
      %p60 = por %p58, %p59
      %p61 = scmp.ne.s32.totalorder %s52, %s53
      %p62 = scmp.eq.s32.totalorder %s21, 0
      %p63 = por %p61, %p62
      %p64 = scmp.ne.s32.totalorder %s52, %s53
      %p65 = scmp.eq.s32.totalorder %s22, 1
      %p66 = por %p64, %p65
      %p68 = scmp.ne.s32.totalorder %s53, %s67
      %p69 = scmp.eq.s32.totalorder %s22, 0
      %p70 = por %p68, %p69
      %s72 = sadd.s32 %s71, 1
      %p75 = scmp.eq.s32.totalorder %s16, 1
      %p76 = scmp.ne.s32.totalorder %s71, %s73
      %p77 = scmp.eq.s32.totalorder %s16, 0
      %p78 = por %p76, %p77
      %p79 = scmp.ne.s32.totalorder %s71, %s73
      %p80 = scmp.eq.s32.totalorder %s21, 1
      %p81 = por %p79, %p80
      %p82 = scmp.ne.s32.totalorder %s73, %s74
      %p83 = scmp.eq.s32.totalorder %s21, 0
      %p84 = por %p82, %p83
      %p85 = scmp.ne.s32.totalorder %s73, %s74
      %p86 = scmp.eq.s32.totalorder %s22, 1
      %p87 = por %p85, %p86
      %p89 = scmp.ne.s32.totalorder %s74, %s88
      %p90 = scmp.eq.s32.totalorder %s22, 0
      %p91 = por %p89, %p90
      %s93 = sadd.s32 %s92, 1
      %p96 = scmp.eq.s32.totalorder %s16, 1
      %p97 = scmp.ne.s32.totalorder %s92, %s94
      %p98 = scmp.eq.s32.totalorder %s16, 0
      %p99 = por %p97, %p98
      %p100 = scmp.ne.s32.totalorder %s92, %s94
      %p101 = scmp.eq.s32.totalorder %s21, 1
      %p102 = por %p100, %p101
      %p103 = scmp.ne.s32.totalorder %s94, %s95
      %p104 = scmp.eq.s32.totalorder %s21, 0
      %p105 = por %p103, %p104
      %p106 = scmp.ne.s32.totalorder %s94, %s95
      %p107 = scmp.eq.s32.totalorder %s22, 1
      %p108 = por %p106, %p107
      %p110 = scmp.ne.s32.totalorder %s95, %s109
      %p111 = scmp.eq.s32.totalorder %s22, 0
      %p112 = por %p110, %p111
      %s114 = sadd.s32 %s113, 1
      %p117 = scmp.eq.s32.totalorder %s16, 1
      %p118 = scmp.ne.s32.totalorder %s113, %s115
      %p119 = scmp.eq.s32.totalorder %s16, 0
      %p120 = por %p118, %p119
      %p121 = scmp.ne.s32.totalorder %s113, %s115
      %p122 = scmp.eq.s32.totalorder %s21, 1
      %p123 = por %p121, %p122
      %p124 = scmp.ne.s32.totalorder %s115, %s116
      %p125 = scmp.eq.s32.totalorder %s21, 0
      %p126 = por %p124, %p125
      %p127 = scmp.ne.s32.totalorder %s115, %s116
      %p128 = scmp.eq.s32.totalorder %s22, 1
      %p129 = por %p127, %p128
      %p131 = scmp.ne.s32.totalorder %s116, %s130
      %p132 = scmp.eq.s32.totalorder %s22, 0
      %p133 = por %p131, %p132
      %s135 = sadd.s32 %s134, 1
      %p138 = scmp.eq.s32.totalorder %s16, 1
      %p139 = scmp.ne.s32.totalorder %s134, %s136
      %p140 = scmp.eq.s32.totalorder %s16, 0
      %p141 = por %p139, %p140
      %p142 = scmp.ne.s32.totalorder %s134, %s136
      %p143 = scmp.eq.s32.totalorder %s21, 1
      %p144 = por %p142, %p143
      %p145 = scmp.ne.s32.totalorder %s136, %s137
      %p146 = scmp.eq.s32.totalorder %s21, 0
      %p147 = por %p145, %p146
      %p148 = scmp.ne.s32.totalorder %s136, %s137
      %p149 = scmp.eq.s32.totalorder %s22, 1
      %p150 = por %p148, %p149
      %p152 = scmp.ne.s32.totalorder %s137, %s151
      %p153 = scmp.eq.s32.totalorder %s22, 0
      %p154 = por %p152, %p153
      %s156 = sadd.s32 %s155, 1
      %p159 = scmp.eq.s32.totalorder %s16, 1
      %p160 = scmp.ne.s32.totalorder %s155, %s157
      %p161 = scmp.eq.s32.totalorder %s16, 0
      %p162 = por %p160, %p161
      %p163 = scmp.ne.s32.totalorder %s155, %s157
      %p164 = scmp.eq.s32.totalorder %s21, 1
      %p165 = por %p163, %p164
      %p166 = scmp.ne.s32.totalorder %s157, %s158
      %p167 = scmp.eq.s32.totalorder %s21, 0
      %p168 = por %p166, %p167
      %p169 = scmp.ne.s32.totalorder %s157, %s158
      %p170 = scmp.eq.s32.totalorder %s22, 1
      %p171 = por %p169, %p170
      %p173 = scmp.ne.s32.totalorder %s158, %s172
      %p174 = scmp.eq.s32.totalorder %s22, 0
      %p175 = por %p173, %p174
      %s176 = ssub.s32 %s16, %s23
      %p177 = scmp.eq.s32.totalorder %s176, 0
      %s179 = sadd.s32 %s178, 1
      %s180 = scalar_select %p177, %s178, %s179
      %p183 = pneg %p177
      %p184 = scmp.eq.s32.totalorder %s16, 1
      %p185 = por %p183, %p184
      %p186 = scmp.ne.s32.totalorder %s178, %s181
      %p187 = scmp.eq.s32.totalorder %s16, 0
      %p188 = por %p186, %p187
      %p189 = scmp.ne.s32.totalorder %s178, %s181
      %p190 = scmp.eq.s32.totalorder %s21, 1
      %p191 = por %p189, %p190
      %p192 = scmp.ne.s32.totalorder %s181, %s182
      %p193 = scmp.eq.s32.totalorder %s21, 0
      %p194 = por %p192, %p193
      %p195 = scmp.ne.s32.totalorder %s181, %s182
      %p196 = scmp.eq.s32.totalorder %s22, 1
      %p197 = por %p195, %p196
      %p199 = scmp.ne.s32.totalorder %s182, %s198
      %p200 = scmp.eq.s32.totalorder %s22, 0
      %p201 = por %p199, %p200
      %p202 = scmp.le.s32.totalorder 1, %s16
      %p203 = scmp.lt.s32.totalorder %s16, 3
      %p204 = pnand %p202, %p203
      %p205 = pneg %p204
      // Predicated region
      $region9: #{tpu_custom_call.1} parent=5 // pred_check
        _
      $region10: #{tpu_custom_call.1} parent=5 // pred_check_branch
        %207 = sbr.rel (%p204) target = $region12
      $region11: #{tpu_custom_call.1} parent=5 // pred_region
        %s208 = ssub.s32 %s16, 1
        // Predicated region
        $region13: #{tpu_custom_call.1} parent=11 // pred_check
          %p209 = pneg %p63
        $region14: #{tpu_custom_call.1} parent=11 // pred_check_branch
          %211 = sbr.rel (%p209) target = $region16
        $region15: #{tpu_custom_call.1} parent=11 // pred_region
          _
        $region16: #{tpu_custom_call.1} parent=11 // pred_fallthru
          _
        // Predicated region
        $region17: #{tpu_custom_call.1} parent=11 // pred_check
          %p212 = pneg %p84
        $region18: #{tpu_custom_call.1} parent=11 // pred_check_branch
          %214 = sbr.rel (%p212) target = $region20
        $region19: #{tpu_custom_call.1} parent=11 // pred_region
          _
        $region20: #{tpu_custom_call.1} parent=11 // pred_fallthru
          _
        // Predicated region
        $region21: #{tpu_custom_call.1} parent=11 // pred_check
          %p215 = pneg %p105
        $region22: #{tpu_custom_call.1} parent=11 // pred_check_branch
          %217 = sbr.rel (%p215) target = $region24
        $region23: #{tpu_custom_call.1} parent=11 // pred_region
          _
        $region24: #{tpu_custom_call.1} parent=11 // pred_fallthru
          _
        // Predicated region
        $region25: #{tpu_custom_call.1} parent=11 // pred_check
          %p218 = pneg %p126
        $region26: #{tpu_custom_call.1} parent=11 // pred_check_branch
          %220 = sbr.rel (%p218) target = $region28
        $region27: #{tpu_custom_call.1} parent=11 // pred_region
          _
        $region28: #{tpu_custom_call.1} parent=11 // pred_fallthru
          _
        // Predicated region
        $region29: #{tpu_custom_call.1} parent=11 // pred_check
          %p221 = pneg %p147
        $region30: #{tpu_custom_call.1} parent=11 // pred_check_branch
          %223 = sbr.rel (%p221) target = $region32
        $region31: #{tpu_custom_call.1} parent=11 // pred_region
          _
        $region32: #{tpu_custom_call.1} parent=11 // pred_fallthru
          _
        // Predicated region
        $region33: #{tpu_custom_call.1} parent=11 // pred_check
          %p224 = pneg %p168
        $region34: #{tpu_custom_call.1} parent=11 // pred_check_branch
          %226 = sbr.rel (%p224) target = $region36
        $region35: #{tpu_custom_call.1} parent=11 // pred_region
          _
        $region36: #{tpu_custom_call.1} parent=11 // pred_fallthru
          _
      $region12: #{tpu_custom_call.1} parent=5 // pred_fallthru
        _
      %p227 = scmp.lt.s32.totalorder %s16, 2
      // Predicated region
      $region37: #{tpu_custom_call.1} parent=5 // pred_check
        %p228 = pneg %p227
      $region38: #{tpu_custom_call.1} parent=5 // pred_check_branch
        %230 = sbr.rel (%p228) target = $region40
      $region39: #{tpu_custom_call.1} parent=5 // pred_region
        // Predicated region
        $region41: #{tpu_custom_call.1} parent=39 // pred_check
          %p231 = pneg %p36
        $region42: #{tpu_custom_call.1} parent=39 // pred_check_branch
          %233 = sbr.rel (%p231) target = $region44
        $region43: #{tpu_custom_call.1} parent=39 // pred_region
          %s234 = smul.u32 2, %s16
          %p235 = scmp.lt.s32.totalorder %s234, 3
          %s236 = scalar_select %p235, %s234, 3
          %s237 = scalar_lea.vmem %s0, %s236
          %s238 = smul.u32 2, %s16
        $region44: #{tpu_custom_call.1} parent=39 // pred_fallthru
          _
      $region40: #{tpu_custom_call.1} parent=5 // pred_fallthru
        _
      %p239 = scmp.le.s32.totalorder 1, %s16
      %p240 = scmp.lt.s32.totalorder %s16, 3
      %p241 = pnand %p239, %p240
      %p242 = pneg %p241
      // Predicated region
      $region45: #{tpu_custom_call.1} parent=5 // pred_check
        _
      $region46: #{tpu_custom_call.1} parent=5 // pred_check_branch
        %244 = sbr.rel (%p241) target = $region48
      $region47: #{tpu_custom_call.1} parent=5 // pred_region
        %s245 = ssub.s32 %s16, 1
        %s246 = smul.u32 2, %s21
        %p247 = scmp.lt.s32.totalorder %s246, 3
        %s248 = scalar_select %p247, %s246, 3
        %s249 = scalar_lea.vmem %s0, %s248
        %p250 = pneg %p42
        %p251 = pneg %p39
        %p252 = pneg %p63
        %p253 = pneg %p60
        %p254 = pneg %p84
        %p255 = pneg %p81
        %p256 = pneg %p105
        %p257 = pneg %p102
        %p258 = pneg %p126
        %p259 = pneg %p123
        %p260 = pneg %p147
        %p261 = pneg %p144
        %p262 = pneg %p168
        %p263 = pneg %p165
        %p264 = pneg %p194
        %p265 = pneg %p191
        %s266 = sand.u32 %s181, 1
        %s267 = scalar_lea.sflag [#allocation3], %s266
        %s268 = sand.u32 %s181, 1
        %s269 = smul.addr %s268, 4
        %s270 = scalar_lea.vmem [#allocation2], %s269
        %s271 = smul.u32 2, %s21
        %p272 = scmp.lt.s32.totalorder %s271, 3
        %s273 = scalar_select %p272, %s271, 3
        %s274 = scalar_lea.vmem %s0, %s273
        %s275 = smul.u32 2, %s21
        %s276 = smul.u32 2, %s21
        %v277 = vld [vmem:[%s274] sm:$0x3]
        %v278 = vld [vmem:[%s1] sm:$0xff]
        %v279 = vld [vmem:[%s1 + $0x8] sm:$0xff]
        %v280 = vld [vmem:[%s1 + $0x10] sm:$0xff]
        %v281 = vld [vmem:[%s1 + $0x18] sm:$0xff]
        %283 = vset.pattern.permute.xlu0 0
        %284 = vperm.xlu0 %283, %v278
        %v285 = vpop.permute.xlu0 %284
        %288 = vset.pattern.permute.xlu0 0
        %289 = vperm.xlu0 %288, %v279
        %v290 = vpop.permute.xlu0 %289
        %293 = vset.pattern.permute.xlu0 0
        %294 = vperm.xlu0 %293, %v280
        %v295 = vpop.permute.xlu0 %294
        %298 = vset.pattern.permute.xlu0 0
        %299 = vperm.xlu0 %298, %v281
        %v300 = vpop.permute.xlu0 %299
        %v303 = vlaneseq
        %v304 = vshrl.u32 %v303, 7
        %v305 = vsub.s32 0, %v304
        %v306 = vrot.slane %v277, %v305
        %v307 = vlaneseq
        %v308 = vshrl.u32 %v307, 7
        %v309 = vsub.s32 1, %v308
        %v310 = vrot.slane %v277, %v309
        %v313 = vmul.f32 %v285, %v306
        %v314 = vmul.f32 %v285, %v310
        %v315 = vmul.f32 %v290, %v306
        %v316 = vmul.f32 %v290, %v310
        %v317 = vmul.f32 %v295, %v306
        %v318 = vmul.f32 %v295, %v310
        %v319 = vmul.f32 %v300, %v306
        %v320 = vmul.f32 %v300, %v310
        %v321 = vld [vmem:[%s2] sm:$0xff]
        %v322 = vld [vmem:[%s2 + $0x8] sm:$0xff]
        %v323 = vld [vmem:[%s2 + $0x10] sm:$0xff]
        %v324 = vld [vmem:[%s2 + $0x18] sm:$0xff]
        %326 = vset.pattern.permute.xlu0 0
        %327 = vperm.xlu0 %326, %v321
        %v328 = vpop.permute.xlu0 %327
        %331 = vset.pattern.permute.xlu0 0
        %332 = vperm.xlu0 %331, %v322
        %v333 = vpop.permute.xlu0 %332
        %336 = vset.pattern.permute.xlu0 0
        %337 = vperm.xlu0 %336, %v323
        %v338 = vpop.permute.xlu0 %337
        %341 = vset.pattern.permute.xlu0 0
        %342 = vperm.xlu0 %341, %v324
        %v343 = vpop.permute.xlu0 %342
        %v345 = vadd.f32 %v313, %v328
        %v346 = vadd.f32 %v314, %v328
        %v347 = vadd.f32 %v315, %v333
        %v348 = vadd.f32 %v316, %v333
        %v349 = vadd.f32 %v317, %v338
        %v350 = vadd.f32 %v318, %v338
        %v351 = vadd.f32 %v319, %v343
        %v352 = vadd.f32 %v320, %v343
        %v353 = vld [vmem:[%s3] sm:$0xff]
        %v354 = vld [vmem:[%s3 + $0x8] sm:$0xff]
        %v355 = vld [vmem:[%s3 + $0x10] sm:$0xff]
        %v356 = vld [vmem:[%s3 + $0x18] sm:$0xff]
        %v357 = vld [vmem:[%s4] sm:$0xff]
        %v358 = vld [vmem:[%s4 + $0x8] sm:$0xff]
        %v359 = vld [vmem:[%s4 + $0x10] sm:$0xff]
        %v360 = vld [vmem:[%s4 + $0x18] sm:$0xff]
        %362 = vset.pattern.permute.xlu0 0
        %363 = vperm.xlu0 %362, %v357
        %v364 = vpop.permute.xlu0 %363
        %367 = vset.pattern.permute.xlu0 0
        %368 = vperm.xlu0 %367, %v358
        %v369 = vpop.permute.xlu0 %368
        %372 = vset.pattern.permute.xlu0 0
        %373 = vperm.xlu0 %372, %v359
        %v374 = vpop.permute.xlu0 %373
        %377 = vset.pattern.permute.xlu0 0
        %378 = vperm.xlu0 %377, %v360
        %v379 = vpop.permute.xlu0 %378
        %vm381 = vcmask 261120
        %v383 = vsel %vm381, %v353, 0
        %v386 = vsel %vm381, %v354, 0
        %v389 = vsel %vm381, %v355, 0
        %v392 = vsel %vm381, %v356, 0
        %394 = vmatprep.subr.mxu0 %v346
        %395 = vmatpush1.msra.mxu0 %v345
        %396 = vmatprep.subr.mxu0 %v348
        %397 = vmatpush1.msra.mxu0 %v347
        %398 = vmatprep.subr.mxu0 %v350
        %399 = vmatpush1.msra.mxu0 %v349
        %400 = vmatprep.subr.mxu0 %v352
        %401 = vmatpush1.msra.mxu0 %v351
        %402 = vmatprep.subr.mxu0 0.0
        %403 = vmatpush1.msra.mxu0 0.0
        %404 = vmatprep.subr.mxu0 0.0
        %405 = vmatpush1.msra.mxu0 0.0
        %406 = vmatprep.subr.mxu0 0.0
        %407 = vmatpush1.msra.mxu0 0.0
        %408 = vmatprep.subr.mxu0 0.0
        %409 = vmatpush1.msra.mxu0 0.0
        %410 = vmatprep.subr.mxu0 0.0
        %411 = vmatpush1.msra.mxu0 0.0
        %412 = vmatprep.subr.mxu0 0.0
        %413 = vmatpush1.msra.mxu0 0.0
        %414 = vmatprep.subr.mxu0 0.0
        %415 = vmatpush1.msra.mxu0 0.0
        %416 = vmatprep.subr.mxu0 0.0
        %417 = vmatpush1.msra.mxu0 0.0
        %418 = vmatprep.subr.mxu0 0.0
        %419 = vmatpush1.msra.mxu0 0.0
        %420 = vmatprep.subr.mxu0 0.0
        %421 = vmatpush1.msra.mxu0 0.0
        %422 = vmatprep.subr.mxu0 0.0
        %423 = vmatpush1.msra.mxu0 0.0
        %424 = vmatprep.subr.mxu0 0.0
        %425 = vmatpush1.msra.mxu0 0.0
        %426 = vmatprep.subr.mxu0 0.0
        %427 = vmatpush1.msra.mxu0 0.0
        %428 = vmatprep.subr.mxu0 0.0
        %429 = vmatpush1.msra.mxu0 0.0
        %430 = vmatprep.subr.mxu0 0.0
        %431 = vmatpush1.msra.mxu0 0.0
        %432 = vmatprep.subr.mxu0 0.0
        %433 = vmatpush1.msra.mxu0 0.0
        %434 = vmatprep.subr.mxu0 0.0
        %435 = vmatpush1.msra.mxu0 0.0
        %436 = vmatprep.subr.mxu0 0.0
        %437 = vmatpush1.msra.mxu0 0.0
        %438 = vmatprep.subr.mxu0 0.0
        %439 = vmatpush1.msra.mxu0 0.0
        %440 = vmatprep.subr.mxu0 0.0
        %441 = vmatpush1.msra.mxu0 0.0
        %442 = vmatprep.subr.mxu0 0.0
        %443 = vmatpush1.msra.mxu0 0.0
        %444 = vmatprep.subr.mxu0 0.0
        %445 = vmatpush1.msra.mxu0 0.0
        %446 = vmatprep.subr.mxu0 0.0
        %447 = vmatpush1.msra.mxu0 0.0
        %448 = vmatprep.subr.mxu0 0.0
        %449 = vmatpush1.msra.mxu0 0.0
        %450 = vmatprep.subr.mxu0 0.0
        %451 = vmatpush1.msra.mxu0 0.0
        %452 = vmatprep.subr.mxu0 0.0
        %453 = vmatpush1.msra.mxu0 0.0
        %454 = vmatprep.subr.mxu0 0.0
        %455 = vmatpush1.msra.mxu0 0.0
        %456 = vmatprep.subr.mxu0 0.0
        %457 = vmatpush1.msra.mxu0 0.0
        %458 = vmatprep.mubr.f32.mxu0 0.0
        %459 = vmatmul.mubr.f32.gmra.mrb[0].mxu0 %v383
        %v460 = vpop.f32.mrb[0].mxu0
        %v461 = vadd.f32 %v364, %v460
        %v462 = vpop.f32.mrb[0].mxu0
        %v463 = vadd.f32 %v364, %v462
        %464 = vmatprep.mubr.f32.mxu0 0.0
        %465 = vmatmul.mubr.f32.gmra.mrb[0].mxu0 %v386
        %v466 = vpop.f32.mrb[0].mxu0
        %v467 = vadd.f32 %v369, %v466
        %v468 = vpop.f32.mrb[0].mxu0
        %v469 = vadd.f32 %v369, %v468
        %470 = vmatprep.mubr.f32.mxu0 0.0
        %471 = vmatmul.mubr.f32.gmra.mrb[0].mxu0 %v389
        %v472 = vpop.f32.mrb[0].mxu0
        %v473 = vadd.f32 %v374, %v472
        %v474 = vpop.f32.mrb[0].mxu0
        %v475 = vadd.f32 %v374, %v474
        %476 = vmatprep.mubr.f32.mxu0 0.0
        %477 = vmatmul.mubr.f32.gmra.mrb[0].mxu0 %v392
        %v478 = vpop.f32.mrb[0].mxu0
        %v479 = vadd.f32 %v379, %v478
        %v480 = vpop.f32.mrb[0].mxu0
        %v481 = vadd.f32 %v379, %v480
        %482 = vdwg.mxu0
        %v483 = vand.u32 2147483647, %v461
        %vm484 = vcmp.le.f32.partialorder %v483, 0.7853982
        %vm485 = vcmp.lt.s32.totalorder %v461, 0
        %v486 = vand.u32 %v461, 2139095040
        %v487 = vshrl.u32 %v486, 23
        %v488 = vsub.s32 %v487, 127
        %v489 = vand.u32 2147483647, %v461
        %v490 = vand.u32 %v489, 8388607
        %v491 = vor.u32 %v490, 8388608
        %v492 = vsub.s32 0, %v491
        %v493 = vadd.s32 %v488, 1
        %vm494 = vcmp.gt.s32.totalorder %v493, 0
        %v495 = vsel %vm494, %v493, 0
        %v496 = vshrl.u32 %v495, 5
        %v497 = vand.u32 %v495, 31
        %v498 = vsub.s32 32, %v497
        %v499 = vshrl.u32 683565275, %v498
        %v500 = vshll.u32 683565275, %v497
        %v501 = vshrl.u32 2475754826, %v498
        %v502 = vor.u32 %v500, %v501
        %v503 = vshll.u32 2475754826, %v497
        %v504 = vshrl.u32 2131351028, %v498
        %v505 = vor.u32 %v503, %v504
        %v506 = vshll.u32 2131351028, %v497
        %v507 = vshrl.u32 2102212464, %v498
        %v508 = vor.u32 %v506, %v507
        %v509 = vshll.u32 2102212464, %v497
        %v510 = vshrl.u32 920167782, %v498
        %v511 = vor.u32 %v509, %v510
        %v512 = vshll.u32 920167782, %v497
        %v513 = vshrl.u32 1326507024, %v498
        %v514 = vor.u32 %v512, %v513
        %vm515 = vcmp.lt.s32.totalorder %v496, 1
        %vm516 = vcmp.lt.s32.totalorder %v496, 2
        %vm517 = vcmp.lt.s32.totalorder %v496, 3
        %vm518 = vcmp.lt.s32.totalorder %v496, 4
        %v519 = vsel %vm515, %v499, %v502
        %v520 = vsel %vm518, %v508, 2102212464
        %v521 = vsel %vm517, %v505, %v520
        %v522 = vsel %vm516, %v519, %v521
        %v523 = vsel %vm515, %v502, %v505
        %v524 = vsel %vm518, %v511, 920167782
        %v525 = vsel %vm517, %v508, %v524
        %v526 = vsel %vm516, %v523, %v525
        %v527 = vsel %vm515, %v505, %v508
        %v528 = vsel %vm518, %v514, 1326507024
        %v529 = vsel %vm517, %v511, %v528
        %v530 = vsel %vm516, %v527, %v529
        %v531 = vshll.u32 %v491, 8
        %v532 = vmul.u32.u64.compose %v531, %v530
        %v533 = vextract.low.u32 %v532
        %v534 = vextract.high.u32 %v532
        %v535 = vmul.u32.u64.compose %v531, %v526
        %v536 = vextract.low.u32 %v535
        %v537 = vextract.high.u32 %v535
        %v538 = vmul.u32 %v531, %v522
        %v539 = vadd.s32 %v534, %v536
        %vm540 = vc.u32 %v534, %v536
        %v541 = vadd.s32 %v537, 1
        %v542 = vsel %vm540, %v541, %v537
        %v543 = vadd.s32 %v538, %v542
        %v544 = vadd.s32 %v543, 536870912
        %v545 = vshrl.u32 %v544, 30
        %v546 = vshll.u32 %v545, 30
        %v547 = vsub.s32 %v543, %v546
        %vm548 = vcmp.lt.s32.totalorder %v547, 0
        %v549 = vsub.s32 0, %v547
        %v550 = vsel %vm548, %v549, %v547
        %v551 = vclz %v550
        %v552 = vsub.s32 %v551, 2
        %vm553 = vcmp.gt.s32.totalorder 0, %v552
        %v554 = vsel %vm553, 0, %v552
        %v555 = vsub.s32 32, %v554
        %v556 = vshll.u32 %v547, %v554
        %v557 = vshrl.u32 %v539, %v555
        %v558 = vor.u32 %v556, %v557
        %v559 = vsub.s32 4294967266, %v554
        %v560 = vadd.s32 %v559, 127
        %v561 = vshll.u32 %v560, 23
        %v562 = vor.u32 4788187, %v561
        %v563 = vand.u32 2147483647, %v562
        %v565 = vcvt.s32.f32 %v558
        %v566 = vmul.f32 %v565, %v563
        %v567 = vxor.u32 %v566, 2147483648
        %v568 = vsel %vm485, %v567, %v566
        %v569 = vsub.s32 4, %v545
        %v570 = vsel %vm485, %v569, %v545
        %v571 = vsel %vm484, %v461, %v568
        %v572 = vsel %vm484, 0, %v570
        %v573 = vcosq.f32.pop %v571
        %v574 = vsinq.f32.pop %v571
        %vm575 = vweird.f32 %v461
        %v576 = vadd.s32 %v572, 3
        %v577 = vand.u32 %v576, 3
        %vm578 = vcmp.lt.s32.totalorder %v577, 2
        %vm579 = vcmp.eq.s32.totalorder %v577, 0
        %v580 = vxor.u32 %v574, 2147483648
        %v581 = vsel %vm579, %v573, %v580
        %vm582 = vcmp.eq.s32.totalorder %v577, 2
        %v583 = vxor.u32 %v573, 2147483648
        %v584 = vsel %vm582, %v583, %v574
        %v585 = vsel %vm578, %v581, %v584
        %v586 = vsel %vm575, nan, %v585
        %v587 = vand.u32 2147483647, %v463
        %vm588 = vcmp.le.f32.partialorder %v587, 0.7853982
        %vm589 = vcmp.lt.s32.totalorder %v463, 0
        %v590 = vand.u32 %v463, 2139095040
        %v591 = vshrl.u32 %v590, 23
        %v592 = vsub.s32 %v591, 127
        %v593 = vand.u32 2147483647, %v463
        %v594 = vand.u32 %v593, 8388607
        %v595 = vor.u32 %v594, 8388608
        %v596 = vsub.s32 0, %v595
        %v597 = vadd.s32 %v592, 1
        %vm598 = vcmp.gt.s32.totalorder %v597, 0
        %v599 = vsel %vm598, %v597, 0
        %v600 = vshrl.u32 %v599, 5
        %v601 = vand.u32 %v599, 31
        %v602 = vsub.s32 32, %v601
        %v603 = vshrl.u32 683565275, %v602
        %v604 = vshll.u32 683565275, %v601
        %v605 = vshrl.u32 2475754826, %v602
        %v606 = vor.u32 %v604, %v605
        %v607 = vshll.u32 2475754826, %v601
        %v608 = vshrl.u32 2131351028, %v602
        %v609 = vor.u32 %v607, %v608
        %v610 = vshll.u32 2131351028, %v601
        %v611 = vshrl.u32 2102212464, %v602
        %v612 = vor.u32 %v610, %v611
        %v613 = vshll.u32 2102212464, %v601
        %v614 = vshrl.u32 920167782, %v602
        %v615 = vor.u32 %v613, %v614
        %v616 = vshll.u32 920167782, %v601
        %v617 = vshrl.u32 1326507024, %v602
        %v618 = vor.u32 %v616, %v617
        %vm619 = vcmp.lt.s32.totalorder %v600, 1
        %vm620 = vcmp.lt.s32.totalorder %v600, 2
        %vm621 = vcmp.lt.s32.totalorder %v600, 3
        %vm622 = vcmp.lt.s32.totalorder %v600, 4
        %v623 = vsel %vm619, %v603, %v606
        %v624 = vsel %vm622, %v612, 2102212464
        %v625 = vsel %vm621, %v609, %v624
        %v626 = vsel %vm620, %v623, %v625
        %v627 = vsel %vm619, %v606, %v609
        %v628 = vsel %vm622, %v615, 920167782
        %v629 = vsel %vm621, %v612, %v628
        %v630 = vsel %vm620, %v627, %v629
        %v631 = vsel %vm619, %v609, %v612
        %v632 = vsel %vm622, %v618, 1326507024
        %v633 = vsel %vm621, %v615, %v632
        %v634 = vsel %vm620, %v631, %v633
        %v635 = vshll.u32 %v595, 8
        %v636 = vmul.u32.u64.compose %v635, %v634
        %v637 = vextract.low.u32 %v636
        %v638 = vextract.high.u32 %v636
        %v639 = vmul.u32.u64.compose %v635, %v630
        %v640 = vextract.low.u32 %v639
        %v641 = vextract.high.u32 %v639
        %v642 = vmul.u32 %v635, %v626
        %v643 = vadd.s32 %v638, %v640
        %vm644 = vc.u32 %v638, %v640
        %v645 = vadd.s32 %v641, 1
        %v646 = vsel %vm644, %v645, %v641
        %v647 = vadd.s32 %v642, %v646
        %v648 = vadd.s32 %v647, 536870912
        %v649 = vshrl.u32 %v648, 30
        %v650 = vshll.u32 %v649, 30
        %v651 = vsub.s32 %v647, %v650
        %vm652 = vcmp.lt.s32.totalorder %v651, 0
        %v653 = vsub.s32 0, %v651
        %v654 = vsel %vm652, %v653, %v651
        %v655 = vclz %v654
        %v656 = vsub.s32 %v655, 2
        %vm657 = vcmp.gt.s32.totalorder 0, %v656
        %v658 = vsel %vm657, 0, %v656
        %v659 = vsub.s32 32, %v658
        %v660 = vshll.u32 %v651, %v658
        %v661 = vshrl.u32 %v643, %v659
        %v662 = vor.u32 %v660, %v661
        %v663 = vsub.s32 4294967266, %v658
        %v664 = vadd.s32 %v663, 127
        %v665 = vshll.u32 %v664, 23
        %v666 = vor.u32 4788187, %v665
        %v667 = vand.u32 2147483647, %v666
        %v669 = vcvt.s32.f32 %v662
        %v670 = vmul.f32 %v669, %v667
        %v671 = vxor.u32 %v670, 2147483648
        %v672 = vsel %vm589, %v671, %v670
        %v673 = vsub.s32 4, %v649
        %v674 = vsel %vm589, %v673, %v649
        %v675 = vsel %vm588, %v463, %v672
        %v676 = vsel %vm588, 0, %v674
        %v677 = vcosq.f32.pop %v675
        %v678 = vsinq.f32.pop %v675
        %vm679 = vweird.f32 %v463
        %v680 = vadd.s32 %v676, 3
        %v681 = vand.u32 %v680, 3
        %vm682 = vcmp.lt.s32.totalorder %v681, 2
        %vm683 = vcmp.eq.s32.totalorder %v681, 0
        %v684 = vxor.u32 %v678, 2147483648
        %v685 = vsel %vm683, %v677, %v684
        %vm686 = vcmp.eq.s32.totalorder %v681, 2
        %v687 = vxor.u32 %v677, 2147483648
        %v688 = vsel %vm686, %v687, %v678
        %v689 = vsel %vm682, %v685, %v688
        %v690 = vsel %vm679, nan, %v689
        %v691 = vand.u32 2147483647, %v467
        %vm692 = vcmp.le.f32.partialorder %v691, 0.7853982
        %vm693 = vcmp.lt.s32.totalorder %v467, 0
        %v694 = vand.u32 %v467, 2139095040
        %v695 = vshrl.u32 %v694, 23
        %v696 = vsub.s32 %v695, 127
        %v697 = vand.u32 2147483647, %v467
        %v698 = vand.u32 %v697, 8388607
        %v699 = vor.u32 %v698, 8388608
        %v700 = vsub.s32 0, %v699
        %v701 = vadd.s32 %v696, 1
        %vm702 = vcmp.gt.s32.totalorder %v701, 0
        %v703 = vsel %vm702, %v701, 0
        %v704 = vshrl.u32 %v703, 5
        %v705 = vand.u32 %v703, 31
        %v706 = vsub.s32 32, %v705
        %v707 = vshrl.u32 683565275, %v706
        %v708 = vshll.u32 683565275, %v705
        %v709 = vshrl.u32 2475754826, %v706
        %v710 = vor.u32 %v708, %v709
        %v711 = vshll.u32 2475754826, %v705
        %v712 = vshrl.u32 2131351028, %v706
        %v713 = vor.u32 %v711, %v712
        %v714 = vshll.u32 2131351028, %v705
        %v715 = vshrl.u32 2102212464, %v706
        %v716 = vor.u32 %v714, %v715
        %v717 = vshll.u32 2102212464, %v705
        %v718 = vshrl.u32 920167782, %v706
        %v719 = vor.u32 %v717, %v718
        %v720 = vshll.u32 920167782, %v705
        %v721 = vshrl.u32 1326507024, %v706
        %v722 = vor.u32 %v720, %v721
        %vm723 = vcmp.lt.s32.totalorder %v704, 1
        %vm724 = vcmp.lt.s32.totalorder %v704, 2
        %vm725 = vcmp.lt.s32.totalorder %v704, 3
        %vm726 = vcmp.lt.s32.totalorder %v704, 4
        %v727 = vsel %vm723, %v707, %v710
        %v728 = vsel %vm726, %v716, 2102212464
        %v729 = vsel %vm725, %v713, %v728
        %v730 = vsel %vm724, %v727, %v729
        %v731 = vsel %vm723, %v710, %v713
        %v732 = vsel %vm726, %v719, 920167782
        %v733 = vsel %vm725, %v716, %v732
        %v734 = vsel %vm724, %v731, %v733
        %v735 = vsel %vm723, %v713, %v716
        %v736 = vsel %vm726, %v722, 1326507024
        %v737 = vsel %vm725, %v719, %v736
        %v738 = vsel %vm724, %v735, %v737
        %v739 = vshll.u32 %v699, 8
        %v740 = vmul.u32.u64.compose %v739, %v738
        %v741 = vextract.low.u32 %v740
        %v742 = vextract.high.u32 %v740
        %v743 = vmul.u32.u64.compose %v739, %v734
        %v744 = vextract.low.u32 %v743
        %v745 = vextract.high.u32 %v743
        %v746 = vmul.u32 %v739, %v730
        %v747 = vadd.s32 %v742, %v744
        %vm748 = vc.u32 %v742, %v744
        %v749 = vadd.s32 %v745, 1
        %v750 = vsel %vm748, %v749, %v745
        %v751 = vadd.s32 %v746, %v750
        %v752 = vadd.s32 %v751, 536870912
        %v753 = vshrl.u32 %v752, 30
        %v754 = vshll.u32 %v753, 30
        %v755 = vsub.s32 %v751, %v754
        %vm756 = vcmp.lt.s32.totalorder %v755, 0
        %v757 = vsub.s32 0, %v755
        %v758 = vsel %vm756, %v757, %v755
        %v759 = vclz %v758
        %v760 = vsub.s32 %v759, 2
        %vm761 = vcmp.gt.s32.totalorder 0, %v760
        %v762 = vsel %vm761, 0, %v760
        %v763 = vsub.s32 32, %v762
        %v764 = vshll.u32 %v755, %v762
        %v765 = vshrl.u32 %v747, %v763
        %v766 = vor.u32 %v764, %v765
        %v767 = vsub.s32 4294967266, %v762
        %v768 = vadd.s32 %v767, 127
        %v769 = vshll.u32 %v768, 23
        %v770 = vor.u32 4788187, %v769
        %v771 = vand.u32 2147483647, %v770
        %v773 = vcvt.s32.f32 %v766
        %v774 = vmul.f32 %v773, %v771
        %v775 = vxor.u32 %v774, 2147483648
        %v776 = vsel %vm693, %v775, %v774
        %v777 = vsub.s32 4, %v753
        %v778 = vsel %vm693, %v777, %v753
        %v779 = vsel %vm692, %v467, %v776
        %v780 = vsel %vm692, 0, %v778
        %v781 = vcosq.f32.pop %v779
        %v782 = vsinq.f32.pop %v779
        %vm783 = vweird.f32 %v467
        %v784 = vadd.s32 %v780, 3
        %v785 = vand.u32 %v784, 3
        %vm786 = vcmp.lt.s32.totalorder %v785, 2
        %vm787 = vcmp.eq.s32.totalorder %v785, 0
        %v788 = vxor.u32 %v782, 2147483648
        %v789 = vsel %vm787, %v781, %v788
        %vm790 = vcmp.eq.s32.totalorder %v785, 2
        %v791 = vxor.u32 %v781, 2147483648
        %v792 = vsel %vm790, %v791, %v782
        %v793 = vsel %vm786, %v789, %v792
        %v794 = vsel %vm783, nan, %v793
        %v795 = vand.u32 2147483647, %v469
        %vm796 = vcmp.le.f32.partialorder %v795, 0.7853982
        %vm797 = vcmp.lt.s32.totalorder %v469, 0
        %v798 = vand.u32 %v469, 2139095040
        %v799 = vshrl.u32 %v798, 23
        %v800 = vsub.s32 %v799, 127
        %v801 = vand.u32 2147483647, %v469
        %v802 = vand.u32 %v801, 8388607
        %v803 = vor.u32 %v802, 8388608
        %v804 = vsub.s32 0, %v803
        %v805 = vadd.s32 %v800, 1
        %vm806 = vcmp.gt.s32.totalorder %v805, 0
        %v807 = vsel %vm806, %v805, 0
        %v808 = vshrl.u32 %v807, 5
        %v809 = vand.u32 %v807, 31
        %v810 = vsub.s32 32, %v809
        %v811 = vshrl.u32 683565275, %v810
        %v812 = vshll.u32 683565275, %v809
        %v813 = vshrl.u32 2475754826, %v810
        %v814 = vor.u32 %v812, %v813
        %v815 = vshll.u32 2475754826, %v809
        %v816 = vshrl.u32 2131351028, %v810
        %v817 = vor.u32 %v815, %v816
        %v818 = vshll.u32 2131351028, %v809
        %v819 = vshrl.u32 2102212464, %v810
        %v820 = vor.u32 %v818, %v819
        %v821 = vshll.u32 2102212464, %v809
        %v822 = vshrl.u32 920167782, %v810
        %v823 = vor.u32 %v821, %v822
        %v824 = vshll.u32 920167782, %v809
        %v825 = vshrl.u32 1326507024, %v810
        %v826 = vor.u32 %v824, %v825
        %vm827 = vcmp.lt.s32.totalorder %v808, 1
        %vm828 = vcmp.lt.s32.totalorder %v808, 2
        %vm829 = vcmp.lt.s32.totalorder %v808, 3
        %vm830 = vcmp.lt.s32.totalorder %v808, 4
        %v831 = vsel %vm827, %v811, %v814
        %v832 = vsel %vm830, %v820, 2102212464
        %v833 = vsel %vm829, %v817, %v832
        %v834 = vsel %vm828, %v831, %v833
        %v835 = vsel %vm827, %v814, %v817
        %v836 = vsel %vm830, %v823, 920167782
        %v837 = vsel %vm829, %v820, %v836
        %v838 = vsel %vm828, %v835, %v837
        %v839 = vsel %vm827, %v817, %v820
        %v840 = vsel %vm830, %v826, 1326507024
        %v841 = vsel %vm829, %v823, %v840
        %v842 = vsel %vm828, %v839, %v841
        %v843 = vshll.u32 %v803, 8
        %v844 = vmul.u32.u64.compose %v843, %v842
        %v845 = vextract.low.u32 %v844
        %v846 = vextract.high.u32 %v844
        %v847 = vmul.u32.u64.compose %v843, %v838
        %v848 = vextract.low.u32 %v847
        %v849 = vextract.high.u32 %v847
        %v850 = vmul.u32 %v843, %v834
        %v851 = vadd.s32 %v846, %v848
        %vm852 = vc.u32 %v846, %v848
        %v853 = vadd.s32 %v849, 1
        %v854 = vsel %vm852, %v853, %v849
        %v855 = vadd.s32 %v850, %v854
        %v856 = vadd.s32 %v855, 536870912
        %v857 = vshrl.u32 %v856, 30
        %v858 = vshll.u32 %v857, 30
        %v859 = vsub.s32 %v855, %v858
        %vm860 = vcmp.lt.s32.totalorder %v859, 0
        %v861 = vsub.s32 0, %v859
        %v862 = vsel %vm860, %v861, %v859
        %v863 = vclz %v862
        %v864 = vsub.s32 %v863, 2
        %vm865 = vcmp.gt.s32.totalorder 0, %v864
        %v866 = vsel %vm865, 0, %v864
        %v867 = vsub.s32 32, %v866
        %v868 = vshll.u32 %v859, %v866
        %v869 = vshrl.u32 %v851, %v867
        %v870 = vor.u32 %v868, %v869
        %v871 = vsub.s32 4294967266, %v866
        %v872 = vadd.s32 %v871, 127
        %v873 = vshll.u32 %v872, 23
        %v874 = vor.u32 4788187, %v873
        %v875 = vand.u32 2147483647, %v874
        %v877 = vcvt.s32.f32 %v870
        %v878 = vmul.f32 %v877, %v875
        %v879 = vxor.u32 %v878, 2147483648
        %v880 = vsel %vm797, %v879, %v878
        %v881 = vsub.s32 4, %v857
        %v882 = vsel %vm797, %v881, %v857
        %v883 = vsel %vm796, %v469, %v880
        %v884 = vsel %vm796, 0, %v882
        %v885 = vcosq.f32.pop %v883
        %v886 = vsinq.f32.pop %v883
        %vm887 = vweird.f32 %v469
        %v888 = vadd.s32 %v884, 3
        %v889 = vand.u32 %v888, 3
        %vm890 = vcmp.lt.s32.totalorder %v889, 2
        %vm891 = vcmp.eq.s32.totalorder %v889, 0
        %v892 = vxor.u32 %v886, 2147483648
        %v893 = vsel %vm891, %v885, %v892
        %vm894 = vcmp.eq.s32.totalorder %v889, 2
        %v895 = vxor.u32 %v885, 2147483648
        %v896 = vsel %vm894, %v895, %v886
        %v897 = vsel %vm890, %v893, %v896
        %v898 = vsel %vm887, nan, %v897
        %v899 = vand.u32 2147483647, %v473
        %vm900 = vcmp.le.f32.partialorder %v899, 0.7853982
        %vm901 = vcmp.lt.s32.totalorder %v473, 0
        %v902 = vand.u32 %v473, 2139095040
        %v903 = vshrl.u32 %v902, 23
        %v904 = vsub.s32 %v903, 127
        %v905 = vand.u32 2147483647, %v473
        %v906 = vand.u32 %v905, 8388607
        %v907 = vor.u32 %v906, 8388608
        %v908 = vsub.s32 0, %v907
        %v909 = vadd.s32 %v904, 1
        %vm910 = vcmp.gt.s32.totalorder %v909, 0
        %v911 = vsel %vm910, %v909, 0
        %v912 = vshrl.u32 %v911, 5
        %v913 = vand.u32 %v911, 31
        %v914 = vsub.s32 32, %v913
        %v915 = vshrl.u32 683565275, %v914
        %v916 = vshll.u32 683565275, %v913
        %v917 = vshrl.u32 2475754826, %v914
        %v918 = vor.u32 %v916, %v917
        %v919 = vshll.u32 2475754826, %v913
        %v920 = vshrl.u32 2131351028, %v914
        %v921 = vor.u32 %v919, %v920
        %v922 = vshll.u32 2131351028, %v913
        %v923 = vshrl.u32 2102212464, %v914
        %v924 = vor.u32 %v922, %v923
        %v925 = vshll.u32 2102212464, %v913
        %v926 = vshrl.u32 920167782, %v914
        %v927 = vor.u32 %v925, %v926
        %v928 = vshll.u32 920167782, %v913
        %v929 = vshrl.u32 1326507024, %v914
        %v930 = vor.u32 %v928, %v929
        %vm931 = vcmp.lt.s32.totalorder %v912, 1
        %vm932 = vcmp.lt.s32.totalorder %v912, 2
        %vm933 = vcmp.lt.s32.totalorder %v912, 3
        %vm934 = vcmp.lt.s32.totalorder %v912, 4
        %v935 = vsel %vm931, %v915, %v918
        %v936 = vsel %vm934, %v924, 2102212464
        %v937 = vsel %vm933, %v921, %v936
        %v938 = vsel %vm932, %v935, %v937
        %v939 = vsel %vm931, %v918, %v921
        %v940 = vsel %vm934, %v927, 920167782
        %v941 = vsel %vm933, %v924, %v940
        %v942 = vsel %vm932, %v939, %v941
        %v943 = vsel %vm931, %v921, %v924
        %v944 = vsel %vm934, %v930, 1326507024
        %v945 = vsel %vm933, %v927, %v944
        %v946 = vsel %vm932, %v943, %v945
        %v947 = vshll.u32 %v907, 8
        %v948 = vmul.u32.u64.compose %v947, %v946
        %v949 = vextract.low.u32 %v948
        %v950 = vextract.high.u32 %v948
        %v951 = vmul.u32.u64.compose %v947, %v942
        %v952 = vextract.low.u32 %v951
        %v953 = vextract.high.u32 %v951
        %v954 = vmul.u32 %v947, %v938
        %v955 = vadd.s32 %v950, %v952
        %vm956 = vc.u32 %v950, %v952
        %v957 = vadd.s32 %v953, 1
        %v958 = vsel %vm956, %v957, %v953
        %v959 = vadd.s32 %v954, %v958
        %v960 = vadd.s32 %v959, 536870912
        %v961 = vshrl.u32 %v960, 30
        %v962 = vshll.u32 %v961, 30
        %v963 = vsub.s32 %v959, %v962
        %vm964 = vcmp.lt.s32.totalorder %v963, 0
        %v965 = vsub.s32 0, %v963
        %v966 = vsel %vm964, %v965, %v963
        %v967 = vclz %v966
        %v968 = vsub.s32 %v967, 2
        %vm969 = vcmp.gt.s32.totalorder 0, %v968
        %v970 = vsel %vm969, 0, %v968
        %v971 = vsub.s32 32, %v970
        %v972 = vshll.u32 %v963, %v970
        %v973 = vshrl.u32 %v955, %v971
        %v974 = vor.u32 %v972, %v973
        %v975 = vsub.s32 4294967266, %v970
        %v976 = vadd.s32 %v975, 127
        %v977 = vshll.u32 %v976, 23
        %v978 = vor.u32 4788187, %v977
        %v979 = vand.u32 2147483647, %v978
        %v981 = vcvt.s32.f32 %v974
        %v982 = vmul.f32 %v981, %v979
        %v983 = vxor.u32 %v982, 2147483648
        %v984 = vsel %vm901, %v983, %v982
        %v985 = vsub.s32 4, %v961
        %v986 = vsel %vm901, %v985, %v961
        %v987 = vsel %vm900, %v473, %v984
        %v988 = vsel %vm900, 0, %v986
        %v989 = vcosq.f32.pop %v987
        %v990 = vsinq.f32.pop %v987
        %vm991 = vweird.f32 %v473
        %v992 = vadd.s32 %v988, 3
        %v993 = vand.u32 %v992, 3
        %vm994 = vcmp.lt.s32.totalorder %v993, 2
        %vm995 = vcmp.eq.s32.totalorder %v993, 0
        %v996 = vxor.u32 %v990, 2147483648
        %v997 = vsel %vm995, %v989, %v996
        %vm998 = vcmp.eq.s32.totalorder %v993, 2
        %v999 = vxor.u32 %v989, 2147483648
        %v1000 = vsel %vm998, %v999, %v990
        %v1001 = vsel %vm994, %v997, %v1000
        %v1002 = vsel %vm991, nan, %v1001
        %v1003 = vand.u32 2147483647, %v475
        %vm1004 = vcmp.le.f32.partialorder %v1003, 0.7853982
        %vm1005 = vcmp.lt.s32.totalorder %v475, 0
        %v1006 = vand.u32 %v475, 2139095040
        %v1007 = vshrl.u32 %v1006, 23
        %v1008 = vsub.s32 %v1007, 127
        %v1009 = vand.u32 2147483647, %v475
        %v1010 = vand.u32 %v1009, 8388607
        %v1011 = vor.u32 %v1010, 8388608
        %v1012 = vsub.s32 0, %v1011
        %v1013 = vadd.s32 %v1008, 1
        %vm1014 = vcmp.gt.s32.totalorder %v1013, 0
        %v1015 = vsel %vm1014, %v1013, 0
        %v1016 = vshrl.u32 %v1015, 5
        %v1017 = vand.u32 %v1015, 31
        %v1018 = vsub.s32 32, %v1017
        %v1019 = vshrl.u32 683565275, %v1018
        %v1020 = vshll.u32 683565275, %v1017
        %v1021 = vshrl.u32 2475754826, %v1018
        %v1022 = vor.u32 %v1020, %v1021
        %v1023 = vshll.u32 2475754826, %v1017
        %v1024 = vshrl.u32 2131351028, %v1018
        %v1025 = vor.u32 %v1023, %v1024
        %v1026 = vshll.u32 2131351028, %v1017
        %v1027 = vshrl.u32 2102212464, %v1018
        %v1028 = vor.u32 %v1026, %v1027
        %v1029 = vshll.u32 2102212464, %v1017
        %v1030 = vshrl.u32 920167782, %v1018
        %v1031 = vor.u32 %v1029, %v1030
        %v1032 = vshll.u32 920167782, %v1017
        %v1033 = vshrl.u32 1326507024, %v1018
        %v1034 = vor.u32 %v1032, %v1033
        %vm1035 = vcmp.lt.s32.totalorder %v1016, 1
        %vm1036 = vcmp.lt.s32.totalorder %v1016, 2
        %vm1037 = vcmp.lt.s32.totalorder %v1016, 3
        %vm1038 = vcmp.lt.s32.totalorder %v1016, 4
        %v1039 = vsel %vm1035, %v1019, %v1022
        %v1040 = vsel %vm1038, %v1028, 2102212464
        %v1041 = vsel %vm1037, %v1025, %v1040
        %v1042 = vsel %vm1036, %v1039, %v1041
        %v1043 = vsel %vm1035, %v1022, %v1025
        %v1044 = vsel %vm1038, %v1031, 920167782
        %v1045 = vsel %vm1037, %v1028, %v1044
        %v1046 = vsel %vm1036, %v1043, %v1045
        %v1047 = vsel %vm1035, %v1025, %v1028
        %v1048 = vsel %vm1038, %v1034, 1326507024
        %v1049 = vsel %vm1037, %v1031, %v1048
        %v1050 = vsel %vm1036, %v1047, %v1049
        %v1051 = vshll.u32 %v1011, 8
        %v1052 = vmul.u32.u64.compose %v1051, %v1050
        %v1053 = vextract.low.u32 %v1052
        %v1054 = vextract.high.u32 %v1052
        %v1055 = vmul.u32.u64.compose %v1051, %v1046
        %v1056 = vextract.low.u32 %v1055
        %v1057 = vextract.high.u32 %v1055
        %v1058 = vmul.u32 %v1051, %v1042
        %v1059 = vadd.s32 %v1054, %v1056
        %vm1060 = vc.u32 %v1054, %v1056
        %v1061 = vadd.s32 %v1057, 1
        %v1062 = vsel %vm1060, %v1061, %v1057
        %v1063 = vadd.s32 %v1058, %v1062
        %v1064 = vadd.s32 %v1063, 536870912
        %v1065 = vshrl.u32 %v1064, 30
        %v1066 = vshll.u32 %v1065, 30
        %v1067 = vsub.s32 %v1063, %v1066
        %vm1068 = vcmp.lt.s32.totalorder %v1067, 0
        %v1069 = vsub.s32 0, %v1067
        %v1070 = vsel %vm1068, %v1069, %v1067
        %v1071 = vclz %v1070
        %v1072 = vsub.s32 %v1071, 2
        %vm1073 = vcmp.gt.s32.totalorder 0, %v1072
        %v1074 = vsel %vm1073, 0, %v1072
        %v1075 = vsub.s32 32, %v1074
        %v1076 = vshll.u32 %v1067, %v1074
        %v1077 = vshrl.u32 %v1059, %v1075
        %v1078 = vor.u32 %v1076, %v1077
        %v1079 = vsub.s32 4294967266, %v1074
        %v1080 = vadd.s32 %v1079, 127
        %v1081 = vshll.u32 %v1080, 23
        %v1082 = vor.u32 4788187, %v1081
        %v1083 = vand.u32 2147483647, %v1082
        %v1085 = vcvt.s32.f32 %v1078
        %v1086 = vmul.f32 %v1085, %v1083
        %v1087 = vxor.u32 %v1086, 2147483648
        %v1088 = vsel %vm1005, %v1087, %v1086
        %v1089 = vsub.s32 4, %v1065
        %v1090 = vsel %vm1005, %v1089, %v1065
        %v1091 = vsel %vm1004, %v475, %v1088
        %v1092 = vsel %vm1004, 0, %v1090
        %v1093 = vcosq.f32.pop %v1091
        %v1094 = vsinq.f32.pop %v1091
        %vm1095 = vweird.f32 %v475
        %v1096 = vadd.s32 %v1092, 3
        %v1097 = vand.u32 %v1096, 3
        %vm1098 = vcmp.lt.s32.totalorder %v1097, 2
        %vm1099 = vcmp.eq.s32.totalorder %v1097, 0
        %v1100 = vxor.u32 %v1094, 2147483648
        %v1101 = vsel %vm1099, %v1093, %v1100
        %vm1102 = vcmp.eq.s32.totalorder %v1097, 2
        %v1103 = vxor.u32 %v1093, 2147483648
        %v1104 = vsel %vm1102, %v1103, %v1094
        %v1105 = vsel %vm1098, %v1101, %v1104
        %v1106 = vsel %vm1095, nan, %v1105
        %v1107 = vand.u32 2147483647, %v479
        %vm1108 = vcmp.le.f32.partialorder %v1107, 0.7853982
        %vm1109 = vcmp.lt.s32.totalorder %v479, 0
        %v1110 = vand.u32 %v479, 2139095040
        %v1111 = vshrl.u32 %v1110, 23
        %v1112 = vsub.s32 %v1111, 127
        %v1113 = vand.u32 2147483647, %v479
        %v1114 = vand.u32 %v1113, 8388607
        %v1115 = vor.u32 %v1114, 8388608
        %v1116 = vsub.s32 0, %v1115
        %v1117 = vadd.s32 %v1112, 1
        %vm1118 = vcmp.gt.s32.totalorder %v1117, 0
        %v1119 = vsel %vm1118, %v1117, 0
        %v1120 = vshrl.u32 %v1119, 5
        %v1121 = vand.u32 %v1119, 31
        %v1122 = vsub.s32 32, %v1121
        %v1123 = vshrl.u32 683565275, %v1122
        %v1124 = vshll.u32 683565275, %v1121
        %v1125 = vshrl.u32 2475754826, %v1122
        %v1126 = vor.u32 %v1124, %v1125
        %v1127 = vshll.u32 2475754826, %v1121
        %v1128 = vshrl.u32 2131351028, %v1122
        %v1129 = vor.u32 %v1127, %v1128
        %v1130 = vshll.u32 2131351028, %v1121
        %v1131 = vshrl.u32 2102212464, %v1122
        %v1132 = vor.u32 %v1130, %v1131
        %v1133 = vshll.u32 2102212464, %v1121
        %v1134 = vshrl.u32 920167782, %v1122
        %v1135 = vor.u32 %v1133, %v1134
        %v1136 = vshll.u32 920167782, %v1121
        %v1137 = vshrl.u32 1326507024, %v1122
        %v1138 = vor.u32 %v1136, %v1137
        %vm1139 = vcmp.lt.s32.totalorder %v1120, 1
        %vm1140 = vcmp.lt.s32.totalorder %v1120, 2
        %vm1141 = vcmp.lt.s32.totalorder %v1120, 3
        %vm1142 = vcmp.lt.s32.totalorder %v1120, 4
        %v1143 = vsel %vm1139, %v1123, %v1126
        %v1144 = vsel %vm1142, %v1132, 2102212464
        %v1145 = vsel %vm1141, %v1129, %v1144
        %v1146 = vsel %vm1140, %v1143, %v1145
        %v1147 = vsel %vm1139, %v1126, %v1129
        %v1148 = vsel %vm1142, %v1135, 920167782
        %v1149 = vsel %vm1141, %v1132, %v1148
        %v1150 = vsel %vm1140, %v1147, %v1149
        %v1151 = vsel %vm1139, %v1129, %v1132
        %v1152 = vsel %vm1142, %v1138, 1326507024
        %v1153 = vsel %vm1141, %v1135, %v1152
        %v1154 = vsel %vm1140, %v1151, %v1153
        %v1155 = vshll.u32 %v1115, 8
        %v1156 = vmul.u32.u64.compose %v1155, %v1154
        %v1157 = vextract.low.u32 %v1156
        %v1158 = vextract.high.u32 %v1156
        %v1159 = vmul.u32.u64.compose %v1155, %v1150
        %v1160 = vextract.low.u32 %v1159
        %v1161 = vextract.high.u32 %v1159
        %v1162 = vmul.u32 %v1155, %v1146
        %v1163 = vadd.s32 %v1158, %v1160
        %vm1164 = vc.u32 %v1158, %v1160
        %v1165 = vadd.s32 %v1161, 1
        %v1166 = vsel %vm1164, %v1165, %v1161
        %v1167 = vadd.s32 %v1162, %v1166
        %v1168 = vadd.s32 %v1167, 536870912
        %v1169 = vshrl.u32 %v1168, 30
        %v1170 = vshll.u32 %v1169, 30
        %v1171 = vsub.s32 %v1167, %v1170
        %vm1172 = vcmp.lt.s32.totalorder %v1171, 0
        %v1173 = vsub.s32 0, %v1171
        %v1174 = vsel %vm1172, %v1173, %v1171
        %v1175 = vclz %v1174
        %v1176 = vsub.s32 %v1175, 2
        %vm1177 = vcmp.gt.s32.totalorder 0, %v1176
        %v1178 = vsel %vm1177, 0, %v1176
        %v1179 = vsub.s32 32, %v1178
        %v1180 = vshll.u32 %v1171, %v1178
        %v1181 = vshrl.u32 %v1163, %v1179
        %v1182 = vor.u32 %v1180, %v1181
        %v1183 = vsub.s32 4294967266, %v1178
        %v1184 = vadd.s32 %v1183, 127
        %v1185 = vshll.u32 %v1184, 23
        %v1186 = vor.u32 4788187, %v1185
        %v1187 = vand.u32 2147483647, %v1186
        %v1189 = vcvt.s32.f32 %v1182
        %v1190 = vmul.f32 %v1189, %v1187
        %v1191 = vxor.u32 %v1190, 2147483648
        %v1192 = vsel %vm1109, %v1191, %v1190
        %v1193 = vsub.s32 4, %v1169
        %v1194 = vsel %vm1109, %v1193, %v1169
        %v1195 = vsel %vm1108, %v479, %v1192
        %v1196 = vsel %vm1108, 0, %v1194
        %v1197 = vcosq.f32.pop %v1195
        %v1198 = vsinq.f32.pop %v1195
        %vm1199 = vweird.f32 %v479
        %v1200 = vadd.s32 %v1196, 3
        %v1201 = vand.u32 %v1200, 3
        %vm1202 = vcmp.lt.s32.totalorder %v1201, 2
        %vm1203 = vcmp.eq.s32.totalorder %v1201, 0
        %v1204 = vxor.u32 %v1198, 2147483648
        %v1205 = vsel %vm1203, %v1197, %v1204
        %vm1206 = vcmp.eq.s32.totalorder %v1201, 2
        %v1207 = vxor.u32 %v1197, 2147483648
        %v1208 = vsel %vm1206, %v1207, %v1198
        %v1209 = vsel %vm1202, %v1205, %v1208
        %v1210 = vsel %vm1199, nan, %v1209
        %v1211 = vand.u32 2147483647, %v481
        %vm1212 = vcmp.le.f32.partialorder %v1211, 0.7853982
        %vm1213 = vcmp.lt.s32.totalorder %v481, 0
        %v1214 = vand.u32 %v481, 2139095040
        %v1215 = vshrl.u32 %v1214, 23
        %v1216 = vsub.s32 %v1215, 127
        %v1217 = vand.u32 2147483647, %v481
        %v1218 = vand.u32 %v1217, 8388607
        %v1219 = vor.u32 %v1218, 8388608
        %v1220 = vsub.s32 0, %v1219
        %v1221 = vadd.s32 %v1216, 1
        %vm1222 = vcmp.gt.s32.totalorder %v1221, 0
        %v1223 = vsel %vm1222, %v1221, 0
        %v1224 = vshrl.u32 %v1223, 5
        %v1225 = vand.u32 %v1223, 31
        %v1226 = vsub.s32 32, %v1225
        %v1227 = vshrl.u32 683565275, %v1226
        %v1228 = vshll.u32 683565275, %v1225
        %v1229 = vshrl.u32 2475754826, %v1226
        %v1230 = vor.u32 %v1228, %v1229
        %v1231 = vshll.u32 2475754826, %v1225
        %v1232 = vshrl.u32 2131351028, %v1226
        %v1233 = vor.u32 %v1231, %v1232
        %v1234 = vshll.u32 2131351028, %v1225
        %v1235 = vshrl.u32 2102212464, %v1226
        %v1236 = vor.u32 %v1234, %v1235
        %v1237 = vshll.u32 2102212464, %v1225
        %v1238 = vshrl.u32 920167782, %v1226
        %v1239 = vor.u32 %v1237, %v1238
        %v1240 = vshll.u32 920167782, %v1225
        %v1241 = vshrl.u32 1326507024, %v1226
        %v1242 = vor.u32 %v1240, %v1241
        %vm1243 = vcmp.lt.s32.totalorder %v1224, 1
        %vm1244 = vcmp.lt.s32.totalorder %v1224, 2
        %vm1245 = vcmp.lt.s32.totalorder %v1224, 3
        %vm1246 = vcmp.lt.s32.totalorder %v1224, 4
        %v1247 = vsel %vm1243, %v1227, %v1230
        %v1248 = vsel %vm1246, %v1236, 2102212464
        %v1249 = vsel %vm1245, %v1233, %v1248
        %v1250 = vsel %vm1244, %v1247, %v1249
        %v1251 = vsel %vm1243, %v1230, %v1233
        %v1252 = vsel %vm1246, %v1239, 920167782
        %v1253 = vsel %vm1245, %v1236, %v1252
        %v1254 = vsel %vm1244, %v1251, %v1253
        %v1255 = vsel %vm1243, %v1233, %v1236
        %v1256 = vsel %vm1246, %v1242, 1326507024
        %v1257 = vsel %vm1245, %v1239, %v1256
        %v1258 = vsel %vm1244, %v1255, %v1257
        %v1259 = vshll.u32 %v1219, 8
        %v1260 = vmul.u32.u64.compose %v1259, %v1258
        %v1261 = vextract.low.u32 %v1260
        %v1262 = vextract.high.u32 %v1260
        %v1263 = vmul.u32.u64.compose %v1259, %v1254
        %v1264 = vextract.low.u32 %v1263
        %v1265 = vextract.high.u32 %v1263
        %v1266 = vmul.u32 %v1259, %v1250
        %v1267 = vadd.s32 %v1262, %v1264
        %vm1268 = vc.u32 %v1262, %v1264
        %v1269 = vadd.s32 %v1265, 1
        %v1270 = vsel %vm1268, %v1269, %v1265
        %v1271 = vadd.s32 %v1266, %v1270
        %v1272 = vadd.s32 %v1271, 536870912
        %v1273 = vshrl.u32 %v1272, 30
        %v1274 = vshll.u32 %v1273, 30
        %v1275 = vsub.s32 %v1271, %v1274
        %vm1276 = vcmp.lt.s32.totalorder %v1275, 0
        %v1277 = vsub.s32 0, %v1275
        %v1278 = vsel %vm1276, %v1277, %v1275
        %v1279 = vclz %v1278
        %v1280 = vsub.s32 %v1279, 2
        %vm1281 = vcmp.gt.s32.totalorder 0, %v1280
        %v1282 = vsel %vm1281, 0, %v1280
        %v1283 = vsub.s32 32, %v1282
        %v1284 = vshll.u32 %v1275, %v1282
        %v1285 = vshrl.u32 %v1267, %v1283
        %v1286 = vor.u32 %v1284, %v1285
        %v1287 = vsub.s32 4294967266, %v1282
        %v1288 = vadd.s32 %v1287, 127
        %v1289 = vshll.u32 %v1288, 23
        %v1290 = vor.u32 4788187, %v1289
        %v1291 = vand.u32 2147483647, %v1290
        %v1293 = vcvt.s32.f32 %v1286
        %v1294 = vmul.f32 %v1293, %v1291
        %v1295 = vxor.u32 %v1294, 2147483648
        %v1296 = vsel %vm1213, %v1295, %v1294
        %v1297 = vsub.s32 4, %v1273
        %v1298 = vsel %vm1213, %v1297, %v1273
        %v1299 = vsel %vm1212, %v481, %v1296
        %v1300 = vsel %vm1212, 0, %v1298
        %v1301 = vcosq.f32.pop %v1299
        %v1302 = vsinq.f32.pop %v1299
        %vm1303 = vweird.f32 %v481
        %v1304 = vadd.s32 %v1300, 3
        %v1305 = vand.u32 %v1304, 3
        %vm1306 = vcmp.lt.s32.totalorder %v1305, 2
        %vm1307 = vcmp.eq.s32.totalorder %v1305, 0
        %v1308 = vxor.u32 %v1302, 2147483648
        %v1309 = vsel %vm1307, %v1301, %v1308
        %vm1310 = vcmp.eq.s32.totalorder %v1305, 2
        %v1311 = vxor.u32 %v1301, 2147483648
        %v1312 = vsel %vm1310, %v1311, %v1302
        %v1313 = vsel %vm1306, %v1309, %v1312
        %v1314 = vsel %vm1303, nan, %v1313
        %1315 = vmatprep.subr.mxu0 %v690
        %1316 = vmatpush1.msra.mxu0 %v586
        %1317 = vmatprep.subr.mxu0 %v898
        %1318 = vmatpush1.msra.mxu0 %v794
        %1319 = vmatprep.subr.mxu0 %v1106
        %1320 = vmatpush1.msra.mxu0 %v1002
        %1321 = vmatprep.subr.mxu0 %v1314
        %1322 = vmatpush1.msra.mxu0 %v1210
        %1323 = vmatprep.subr.mxu0 0.0
        %1324 = vmatpush1.msra.mxu0 0.0
        %1325 = vmatprep.subr.mxu0 0.0
        %1326 = vmatpush1.msra.mxu0 0.0
        %1327 = vmatprep.subr.mxu0 0.0
        %1328 = vmatpush1.msra.mxu0 0.0
        %1329 = vmatprep.subr.mxu0 0.0
        %1330 = vmatpush1.msra.mxu0 0.0
        %1331 = vmatprep.subr.mxu0 0.0
        %1332 = vmatpush1.msra.mxu0 0.0
        %1333 = vmatprep.subr.mxu0 0.0
        %1334 = vmatpush1.msra.mxu0 0.0
        %1335 = vmatprep.subr.mxu0 0.0
        %1336 = vmatpush1.msra.mxu0 0.0
        %1337 = vmatprep.subr.mxu0 0.0
        %1338 = vmatpush1.msra.mxu0 0.0
        %1339 = vmatprep.subr.mxu0 0.0
        %1340 = vmatpush1.msra.mxu0 0.0
        %1341 = vmatprep.subr.mxu0 0.0
        %1342 = vmatpush1.msra.mxu0 0.0
        %1343 = vmatprep.subr.mxu0 0.0
        %1344 = vmatpush1.msra.mxu0 0.0
        %1345 = vmatprep.subr.mxu0 0.0
        %1346 = vmatpush1.msra.mxu0 0.0
        %1347 = vmatprep.subr.mxu0 0.0
        %1348 = vmatpush1.msra.mxu0 0.0
        %1349 = vmatprep.subr.mxu0 0.0
        %1350 = vmatpush1.msra.mxu0 0.0
        %1351 = vmatprep.subr.mxu0 0.0
        %1352 = vmatpush1.msra.mxu0 0.0
        %1353 = vmatprep.subr.mxu0 0.0
        %1354 = vmatpush1.msra.mxu0 0.0
        %1355 = vmatprep.subr.mxu0 0.0
        %1356 = vmatpush1.msra.mxu0 0.0
        %1357 = vmatprep.subr.mxu0 0.0
        %1358 = vmatpush1.msra.mxu0 0.0
        %1359 = vmatprep.subr.mxu0 0.0
        %1360 = vmatpush1.msra.mxu0 0.0
        %1361 = vmatprep.subr.mxu0 0.0
        %1362 = vmatpush1.msra.mxu0 0.0
        %1363 = vmatprep.subr.mxu0 0.0
        %1364 = vmatpush1.msra.mxu0 0.0
        %1365 = vmatprep.subr.mxu0 0.0
        %1366 = vmatpush1.msra.mxu0 0.0
        %1367 = vmatprep.subr.mxu0 0.0
        %1368 = vmatpush1.msra.mxu0 0.0
        %1369 = vmatprep.subr.mxu0 0.0
        %1370 = vmatpush1.msra.mxu0 0.0
        %1371 = vmatprep.subr.mxu0 0.0
        %1372 = vmatpush1.msra.mxu0 0.0
        %1373 = vmatprep.subr.mxu0 0.0
        %1374 = vmatpush1.msra.mxu0 0.0
        %1375 = vmatprep.subr.mxu0 0.0
        %1376 = vmatpush1.msra.mxu0 0.0
        %1377 = vmatprep.subr.mxu0 0.0
        %1378 = vmatpush1.msra.mxu0 0.0
        %1379 = vmatprep.mubr.f32.mxu0 0.0
        %1380 = vmatmul.mubr.f32.gmra.mrb[0].mxu0 %v383
        %v1381 = vpop.f32.mrb[0].mxu0
        %v1382 = vadd.f32 %v364, %v1381
        %v1383 = vpop.f32.mrb[0].mxu0
        %v1384 = vadd.f32 %v364, %v1383
        %1385 = vmatprep.mubr.f32.mxu0 0.0
        %1386 = vmatmul.mubr.f32.gmra.mrb[0].mxu0 %v386
        %v1387 = vpop.f32.mrb[0].mxu0
        %v1388 = vadd.f32 %v369, %v1387
        %v1389 = vpop.f32.mrb[0].mxu0
        %v1390 = vadd.f32 %v369, %v1389
        %1391 = vmatprep.mubr.f32.mxu0 0.0
        %1392 = vmatmul.mubr.f32.gmra.mrb[0].mxu0 %v389
        %v1393 = vpop.f32.mrb[0].mxu0
        %v1394 = vadd.f32 %v374, %v1393
        %v1395 = vpop.f32.mrb[0].mxu0
        %v1396 = vadd.f32 %v374, %v1395
        %1397 = vmatprep.mubr.f32.mxu0 0.0
        %1398 = vmatmul.mubr.f32.gmra.mrb[0].mxu0 %v392
        %v1399 = vpop.f32.mrb[0].mxu0
        %v1400 = vadd.f32 %v379, %v1399
        %v1401 = vpop.f32.mrb[0].mxu0
        %v1402 = vadd.f32 %v379, %v1401
        %1403 = vdwg.mxu0
        %v1404 = vand.u32 2147483647, %v1382
        %vm1405 = vcmp.le.f32.partialorder %v1404, 0.7853982
        %vm1406 = vcmp.lt.s32.totalorder %v1382, 0
        %v1407 = vand.u32 %v1382, 2139095040
        %v1408 = vshrl.u32 %v1407, 23
        %v1409 = vsub.s32 %v1408, 127
        %v1410 = vand.u32 2147483647, %v1382
        %v1411 = vand.u32 %v1410, 8388607
        %v1412 = vor.u32 %v1411, 8388608
        %v1413 = vsub.s32 0, %v1412
        %v1414 = vadd.s32 %v1409, 1
        %vm1415 = vcmp.gt.s32.totalorder %v1414, 0
        %v1416 = vsel %vm1415, %v1414, 0
        %v1417 = vshrl.u32 %v1416, 5
        %v1418 = vand.u32 %v1416, 31
        %v1419 = vsub.s32 32, %v1418
        %v1420 = vshrl.u32 683565275, %v1419
        %v1421 = vshll.u32 683565275, %v1418
        %v1422 = vshrl.u32 2475754826, %v1419
        %v1423 = vor.u32 %v1421, %v1422
        %v1424 = vshll.u32 2475754826, %v1418
        %v1425 = vshrl.u32 2131351028, %v1419
        %v1426 = vor.u32 %v1424, %v1425
        %v1427 = vshll.u32 2131351028, %v1418
        %v1428 = vshrl.u32 2102212464, %v1419
        %v1429 = vor.u32 %v1427, %v1428
        %v1430 = vshll.u32 2102212464, %v1418
        %v1431 = vshrl.u32 920167782, %v1419
        %v1432 = vor.u32 %v1430, %v1431
        %v1433 = vshll.u32 920167782, %v1418
        %v1434 = vshrl.u32 1326507024, %v1419
        %v1435 = vor.u32 %v1433, %v1434
        %vm1436 = vcmp.lt.s32.totalorder %v1417, 1
        %vm1437 = vcmp.lt.s32.totalorder %v1417, 2
        %vm1438 = vcmp.lt.s32.totalorder %v1417, 3
        %vm1439 = vcmp.lt.s32.totalorder %v1417, 4
        %v1440 = vsel %vm1436, %v1420, %v1423
        %v1441 = vsel %vm1439, %v1429, 2102212464
        %v1442 = vsel %vm1438, %v1426, %v1441
        %v1443 = vsel %vm1437, %v1440, %v1442
        %v1444 = vsel %vm1436, %v1423, %v1426
        %v1445 = vsel %vm1439, %v1432, 920167782
        %v1446 = vsel %vm1438, %v1429, %v1445
        %v1447 = vsel %vm1437, %v1444, %v1446
        %v1448 = vsel %vm1436, %v1426, %v1429
        %v1449 = vsel %vm1439, %v1435, 1326507024
        %v1450 = vsel %vm1438, %v1432, %v1449
        %v1451 = vsel %vm1437, %v1448, %v1450
        %v1452 = vshll.u32 %v1412, 8
        %v1453 = vmul.u32.u64.compose %v1452, %v1451
        %v1454 = vextract.low.u32 %v1453
        %v1455 = vextract.high.u32 %v1453
        %v1456 = vmul.u32.u64.compose %v1452, %v1447
        %v1457 = vextract.low.u32 %v1456
        %v1458 = vextract.high.u32 %v1456
        %v1459 = vmul.u32 %v1452, %v1443
        %v1460 = vadd.s32 %v1455, %v1457
        %vm1461 = vc.u32 %v1455, %v1457
        %v1462 = vadd.s32 %v1458, 1
        %v1463 = vsel %vm1461, %v1462, %v1458
        %v1464 = vadd.s32 %v1459, %v1463
        %v1465 = vadd.s32 %v1464, 536870912
        %v1466 = vshrl.u32 %v1465, 30
        %v1467 = vshll.u32 %v1466, 30
        %v1468 = vsub.s32 %v1464, %v1467
        %vm1469 = vcmp.lt.s32.totalorder %v1468, 0
        %v1470 = vsub.s32 0, %v1468
        %v1471 = vsel %vm1469, %v1470, %v1468
        %v1472 = vclz %v1471
        %v1473 = vsub.s32 %v1472, 2
        %vm1474 = vcmp.gt.s32.totalorder 0, %v1473
        %v1475 = vsel %vm1474, 0, %v1473
        %v1476 = vsub.s32 32, %v1475
        %v1477 = vshll.u32 %v1468, %v1475
        %v1478 = vshrl.u32 %v1460, %v1476
        %v1479 = vor.u32 %v1477, %v1478
        %v1480 = vsub.s32 4294967266, %v1475
        %v1481 = vadd.s32 %v1480, 127
        %v1482 = vshll.u32 %v1481, 23
        %v1483 = vor.u32 4788187, %v1482
        %v1484 = vand.u32 2147483647, %v1483
        %v1486 = vcvt.s32.f32 %v1479
        %v1487 = vmul.f32 %v1486, %v1484
        %v1488 = vxor.u32 %v1487, 2147483648
        %v1489 = vsel %vm1406, %v1488, %v1487
        %v1490 = vsub.s32 4, %v1466
        %v1491 = vsel %vm1406, %v1490, %v1466
        %v1492 = vsel %vm1405, %v1382, %v1489
        %v1493 = vsel %vm1405, 0, %v1491
        %v1494 = vcosq.f32.pop %v1492
        %v1495 = vsinq.f32.pop %v1492
        %vm1496 = vweird.f32 %v1382
        %v1497 = vadd.s32 %v1493, 3
        %v1498 = vand.u32 %v1497, 3
        %vm1499 = vcmp.lt.s32.totalorder %v1498, 2
        %vm1500 = vcmp.eq.s32.totalorder %v1498, 0
        %v1501 = vxor.u32 %v1495, 2147483648
        %v1502 = vsel %vm1500, %v1494, %v1501
        %vm1503 = vcmp.eq.s32.totalorder %v1498, 2
        %v1504 = vxor.u32 %v1494, 2147483648
        %v1505 = vsel %vm1503, %v1504, %v1495
        %v1506 = vsel %vm1499, %v1502, %v1505
        %v1507 = vsel %vm1496, nan, %v1506
        %v1508 = vand.u32 2147483647, %v1384
        %vm1509 = vcmp.le.f32.partialorder %v1508, 0.7853982
        %vm1510 = vcmp.lt.s32.totalorder %v1384, 0
        %v1511 = vand.u32 %v1384, 2139095040
        %v1512 = vshrl.u32 %v1511, 23
        %v1513 = vsub.s32 %v1512, 127
        %v1514 = vand.u32 2147483647, %v1384
        %v1515 = vand.u32 %v1514, 8388607
        %v1516 = vor.u32 %v1515, 8388608
        %v1517 = vsub.s32 0, %v1516
        %v1518 = vadd.s32 %v1513, 1
        %vm1519 = vcmp.gt.s32.totalorder %v1518, 0
        %v1520 = vsel %vm1519, %v1518, 0
        %v1521 = vshrl.u32 %v1520, 5
        %v1522 = vand.u32 %v1520, 31
        %v1523 = vsub.s32 32, %v1522
        %v1524 = vshrl.u32 683565275, %v1523
        %v1525 = vshll.u32 683565275, %v1522
        %v1526 = vshrl.u32 2475754826, %v1523
        %v1527 = vor.u32 %v1525, %v1526
        %v1528 = vshll.u32 2475754826, %v1522
        %v1529 = vshrl.u32 2131351028, %v1523
        %v1530 = vor.u32 %v1528, %v1529
        %v1531 = vshll.u32 2131351028, %v1522
        %v1532 = vshrl.u32 2102212464, %v1523
        %v1533 = vor.u32 %v1531, %v1532
        %v1534 = vshll.u32 2102212464, %v1522
        %v1535 = vshrl.u32 920167782, %v1523
        %v1536 = vor.u32 %v1534, %v1535
        %v1537 = vshll.u32 920167782, %v1522
        %v1538 = vshrl.u32 1326507024, %v1523
        %v1539 = vor.u32 %v1537, %v1538
        %vm1540 = vcmp.lt.s32.totalorder %v1521, 1
        %vm1541 = vcmp.lt.s32.totalorder %v1521, 2
        %vm1542 = vcmp.lt.s32.totalorder %v1521, 3
        %vm1543 = vcmp.lt.s32.totalorder %v1521, 4
        %v1544 = vsel %vm1540, %v1524, %v1527
        %v1545 = vsel %vm1543, %v1533, 2102212464
        %v1546 = vsel %vm1542, %v1530, %v1545
        %v1547 = vsel %vm1541, %v1544, %v1546
        %v1548 = vsel %vm1540, %v1527, %v1530
        %v1549 = vsel %vm1543, %v1536, 920167782
        %v1550 = vsel %vm1542, %v1533, %v1549
        %v1551 = vsel %vm1541, %v1548, %v1550
        %v1552 = vsel %vm1540, %v1530, %v1533
        %v1553 = vsel %vm1543, %v1539, 1326507024
        %v1554 = vsel %vm1542, %v1536, %v1553
        %v1555 = vsel %vm1541, %v1552, %v1554
        %v1556 = vshll.u32 %v1516, 8
        %v1557 = vmul.u32.u64.compose %v1556, %v1555
        %v1558 = vextract.low.u32 %v1557
        %v1559 = vextract.high.u32 %v1557
        %v1560 = vmul.u32.u64.compose %v1556, %v1551
        %v1561 = vextract.low.u32 %v1560
        %v1562 = vextract.high.u32 %v1560
        %v1563 = vmul.u32 %v1556, %v1547
        %v1564 = vadd.s32 %v1559, %v1561
        %vm1565 = vc.u32 %v1559, %v1561
        %v1566 = vadd.s32 %v1562, 1
        %v1567 = vsel %vm1565, %v1566, %v1562
        %v1568 = vadd.s32 %v1563, %v1567
        %v1569 = vadd.s32 %v1568, 536870912
        %v1570 = vshrl.u32 %v1569, 30
        %v1571 = vshll.u32 %v1570, 30
        %v1572 = vsub.s32 %v1568, %v1571
        %vm1573 = vcmp.lt.s32.totalorder %v1572, 0
        %v1574 = vsub.s32 0, %v1572
        %v1575 = vsel %vm1573, %v1574, %v1572
        %v1576 = vclz %v1575
        %v1577 = vsub.s32 %v1576, 2
        %vm1578 = vcmp.gt.s32.totalorder 0, %v1577
        %v1579 = vsel %vm1578, 0, %v1577
        %v1580 = vsub.s32 32, %v1579
        %v1581 = vshll.u32 %v1572, %v1579
        %v1582 = vshrl.u32 %v1564, %v1580
        %v1583 = vor.u32 %v1581, %v1582
        %v1584 = vsub.s32 4294967266, %v1579
        %v1585 = vadd.s32 %v1584, 127
        %v1586 = vshll.u32 %v1585, 23
        %v1587 = vor.u32 4788187, %v1586
        %v1588 = vand.u32 2147483647, %v1587
        %v1590 = vcvt.s32.f32 %v1583
        %v1591 = vmul.f32 %v1590, %v1588
        %v1592 = vxor.u32 %v1591, 2147483648
        %v1593 = vsel %vm1510, %v1592, %v1591
        %v1594 = vsub.s32 4, %v1570
        %v1595 = vsel %vm1510, %v1594, %v1570
        %v1596 = vsel %vm1509, %v1384, %v1593
        %v1597 = vsel %vm1509, 0, %v1595
        %v1598 = vcosq.f32.pop %v1596
        %v1599 = vsinq.f32.pop %v1596
        %vm1600 = vweird.f32 %v1384
        %v1601 = vadd.s32 %v1597, 3
        %v1602 = vand.u32 %v1601, 3
        %vm1603 = vcmp.lt.s32.totalorder %v1602, 2
        %vm1604 = vcmp.eq.s32.totalorder %v1602, 0
        %v1605 = vxor.u32 %v1599, 2147483648
        %v1606 = vsel %vm1604, %v1598, %v1605
        %vm1607 = vcmp.eq.s32.totalorder %v1602, 2
        %v1608 = vxor.u32 %v1598, 2147483648
        %v1609 = vsel %vm1607, %v1608, %v1599
        %v1610 = vsel %vm1603, %v1606, %v1609
        %v1611 = vsel %vm1600, nan, %v1610
        %v1612 = vand.u32 2147483647, %v1388
        %vm1613 = vcmp.le.f32.partialorder %v1612, 0.7853982
        %vm1614 = vcmp.lt.s32.totalorder %v1388, 0
        %v1615 = vand.u32 %v1388, 2139095040
        %v1616 = vshrl.u32 %v1615, 23
        %v1617 = vsub.s32 %v1616, 127
        %v1618 = vand.u32 2147483647, %v1388
        %v1619 = vand.u32 %v1618, 8388607
        %v1620 = vor.u32 %v1619, 8388608
        %v1621 = vsub.s32 0, %v1620
        %v1622 = vadd.s32 %v1617, 1
        %vm1623 = vcmp.gt.s32.totalorder %v1622, 0
        %v1624 = vsel %vm1623, %v1622, 0
        %v1625 = vshrl.u32 %v1624, 5
        %v1626 = vand.u32 %v1624, 31
        %v1627 = vsub.s32 32, %v1626
        %v1628 = vshrl.u32 683565275, %v1627
        %v1629 = vshll.u32 683565275, %v1626
        %v1630 = vshrl.u32 2475754826, %v1627
        %v1631 = vor.u32 %v1629, %v1630
        %v1632 = vshll.u32 2475754826, %v1626
        %v1633 = vshrl.u32 2131351028, %v1627
        %v1634 = vor.u32 %v1632, %v1633
        %v1635 = vshll.u32 2131351028, %v1626
        %v1636 = vshrl.u32 2102212464, %v1627
        %v1637 = vor.u32 %v1635, %v1636
        %v1638 = vshll.u32 2102212464, %v1626
        %v1639 = vshrl.u32 920167782, %v1627
        %v1640 = vor.u32 %v1638, %v1639
        %v1641 = vshll.u32 920167782, %v1626
        %v1642 = vshrl.u32 1326507024, %v1627
        %v1643 = vor.u32 %v1641, %v1642
        %vm1644 = vcmp.lt.s32.totalorder %v1625, 1
        %vm1645 = vcmp.lt.s32.totalorder %v1625, 2
        %vm1646 = vcmp.lt.s32.totalorder %v1625, 3
        %vm1647 = vcmp.lt.s32.totalorder %v1625, 4
        %v1648 = vsel %vm1644, %v1628, %v1631
        %v1649 = vsel %vm1647, %v1637, 2102212464
        %v1650 = vsel %vm1646, %v1634, %v1649
        %v1651 = vsel %vm1645, %v1648, %v1650
        %v1652 = vsel %vm1644, %v1631, %v1634
        %v1653 = vsel %vm1647, %v1640, 920167782
        %v1654 = vsel %vm1646, %v1637, %v1653
        %v1655 = vsel %vm1645, %v1652, %v1654
        %v1656 = vsel %vm1644, %v1634, %v1637
        %v1657 = vsel %vm1647, %v1643, 1326507024
        %v1658 = vsel %vm1646, %v1640, %v1657
        %v1659 = vsel %vm1645, %v1656, %v1658
        %v1660 = vshll.u32 %v1620, 8
        %v1661 = vmul.u32.u64.compose %v1660, %v1659
        %v1662 = vextract.low.u32 %v1661
        %v1663 = vextract.high.u32 %v1661
        %v1664 = vmul.u32.u64.compose %v1660, %v1655
        %v1665 = vextract.low.u32 %v1664
        %v1666 = vextract.high.u32 %v1664
        %v1667 = vmul.u32 %v1660, %v1651
        %v1668 = vadd.s32 %v1663, %v1665
        %vm1669 = vc.u32 %v1663, %v1665
        %v1670 = vadd.s32 %v1666, 1
        %v1671 = vsel %vm1669, %v1670, %v1666
        %v1672 = vadd.s32 %v1667, %v1671
        %v1673 = vadd.s32 %v1672, 536870912
        %v1674 = vshrl.u32 %v1673, 30
        %v1675 = vshll.u32 %v1674, 30
        %v1676 = vsub.s32 %v1672, %v1675
        %vm1677 = vcmp.lt.s32.totalorder %v1676, 0
        %v1678 = vsub.s32 0, %v1676
        %v1679 = vsel %vm1677, %v1678, %v1676
        %v1680 = vclz %v1679
        %v1681 = vsub.s32 %v1680, 2
        %vm1682 = vcmp.gt.s32.totalorder 0, %v1681
        %v1683 = vsel %vm1682, 0, %v1681
        %v1684 = vsub.s32 32, %v1683
        %v1685 = vshll.u32 %v1676, %v1683
        %v1686 = vshrl.u32 %v1668, %v1684
        %v1687 = vor.u32 %v1685, %v1686
        %v1688 = vsub.s32 4294967266, %v1683
        %v1689 = vadd.s32 %v1688, 127
        %v1690 = vshll.u32 %v1689, 23
        %v1691 = vor.u32 4788187, %v1690
        %v1692 = vand.u32 2147483647, %v1691
        %v1694 = vcvt.s32.f32 %v1687
        %v1695 = vmul.f32 %v1694, %v1692
        %v1696 = vxor.u32 %v1695, 2147483648
        %v1697 = vsel %vm1614, %v1696, %v1695
        %v1698 = vsub.s32 4, %v1674
        %v1699 = vsel %vm1614, %v1698, %v1674
        %v1700 = vsel %vm1613, %v1388, %v1697
        %v1701 = vsel %vm1613, 0, %v1699
        %v1702 = vcosq.f32.pop %v1700
        %v1703 = vsinq.f32.pop %v1700
        %vm1704 = vweird.f32 %v1388
        %v1705 = vadd.s32 %v1701, 3
        %v1706 = vand.u32 %v1705, 3
        %vm1707 = vcmp.lt.s32.totalorder %v1706, 2
        %vm1708 = vcmp.eq.s32.totalorder %v1706, 0
        %v1709 = vxor.u32 %v1703, 2147483648
        %v1710 = vsel %vm1708, %v1702, %v1709
        %vm1711 = vcmp.eq.s32.totalorder %v1706, 2
        %v1712 = vxor.u32 %v1702, 2147483648
        %v1713 = vsel %vm1711, %v1712, %v1703
        %v1714 = vsel %vm1707, %v1710, %v1713
        %v1715 = vsel %vm1704, nan, %v1714
        %v1716 = vand.u32 2147483647, %v1390
        %vm1717 = vcmp.le.f32.partialorder %v1716, 0.7853982
        %vm1718 = vcmp.lt.s32.totalorder %v1390, 0
        %v1719 = vand.u32 %v1390, 2139095040
        %v1720 = vshrl.u32 %v1719, 23
        %v1721 = vsub.s32 %v1720, 127
        %v1722 = vand.u32 2147483647, %v1390
        %v1723 = vand.u32 %v1722, 8388607
        %v1724 = vor.u32 %v1723, 8388608
        %v1725 = vsub.s32 0, %v1724
        %v1726 = vadd.s32 %v1721, 1
        %vm1727 = vcmp.gt.s32.totalorder %v1726, 0
        %v1728 = vsel %vm1727, %v1726, 0
        %v1729 = vshrl.u32 %v1728, 5
        %v1730 = vand.u32 %v1728, 31
        %v1731 = vsub.s32 32, %v1730
        %v1732 = vshrl.u32 683565275, %v1731
        %v1733 = vshll.u32 683565275, %v1730
        %v1734 = vshrl.u32 2475754826, %v1731
        %v1735 = vor.u32 %v1733, %v1734
        %v1736 = vshll.u32 2475754826, %v1730
        %v1737 = vshrl.u32 2131351028, %v1731
        %v1738 = vor.u32 %v1736, %v1737
        %v1739 = vshll.u32 2131351028, %v1730
        %v1740 = vshrl.u32 2102212464, %v1731
        %v1741 = vor.u32 %v1739, %v1740
        %v1742 = vshll.u32 2102212464, %v1730
        %v1743 = vshrl.u32 920167782, %v1731
        %v1744 = vor.u32 %v1742, %v1743
        %v1745 = vshll.u32 920167782, %v1730
        %v1746 = vshrl.u32 1326507024, %v1731
        %v1747 = vor.u32 %v1745, %v1746
        %vm1748 = vcmp.lt.s32.totalorder %v1729, 1
        %vm1749 = vcmp.lt.s32.totalorder %v1729, 2
        %vm1750 = vcmp.lt.s32.totalorder %v1729, 3
        %vm1751 = vcmp.lt.s32.totalorder %v1729, 4
        %v1752 = vsel %vm1748, %v1732, %v1735
        %v1753 = vsel %vm1751, %v1741, 2102212464
        %v1754 = vsel %vm1750, %v1738, %v1753
        %v1755 = vsel %vm1749, %v1752, %v1754
        %v1756 = vsel %vm1748, %v1735, %v1738
        %v1757 = vsel %vm1751, %v1744, 920167782
        %v1758 = vsel %vm1750, %v1741, %v1757
        %v1759 = vsel %vm1749, %v1756, %v1758
        %v1760 = vsel %vm1748, %v1738, %v1741
        %v1761 = vsel %vm1751, %v1747, 1326507024
        %v1762 = vsel %vm1750, %v1744, %v1761
        %v1763 = vsel %vm1749, %v1760, %v1762
        %v1764 = vshll.u32 %v1724, 8
        %v1765 = vmul.u32.u64.compose %v1764, %v1763
        %v1766 = vextract.low.u32 %v1765
        %v1767 = vextract.high.u32 %v1765
        %v1768 = vmul.u32.u64.compose %v1764, %v1759
        %v1769 = vextract.low.u32 %v1768
        %v1770 = vextract.high.u32 %v1768
        %v1771 = vmul.u32 %v1764, %v1755
        %v1772 = vadd.s32 %v1767, %v1769
        %vm1773 = vc.u32 %v1767, %v1769
        %v1774 = vadd.s32 %v1770, 1
        %v1775 = vsel %vm1773, %v1774, %v1770
        %v1776 = vadd.s32 %v1771, %v1775
        %v1777 = vadd.s32 %v1776, 536870912
        %v1778 = vshrl.u32 %v1777, 30
        %v1779 = vshll.u32 %v1778, 30
        %v1780 = vsub.s32 %v1776, %v1779
        %vm1781 = vcmp.lt.s32.totalorder %v1780, 0
        %v1782 = vsub.s32 0, %v1780
        %v1783 = vsel %vm1781, %v1782, %v1780
        %v1784 = vclz %v1783
        %v1785 = vsub.s32 %v1784, 2
        %vm1786 = vcmp.gt.s32.totalorder 0, %v1785
        %v1787 = vsel %vm1786, 0, %v1785
        %v1788 = vsub.s32 32, %v1787
        %v1789 = vshll.u32 %v1780, %v1787
        %v1790 = vshrl.u32 %v1772, %v1788
        %v1791 = vor.u32 %v1789, %v1790
        %v1792 = vsub.s32 4294967266, %v1787
        %v1793 = vadd.s32 %v1792, 127
        %v1794 = vshll.u32 %v1793, 23
        %v1795 = vor.u32 4788187, %v1794
        %v1796 = vand.u32 2147483647, %v1795
        %v1798 = vcvt.s32.f32 %v1791
        %v1799 = vmul.f32 %v1798, %v1796
        %v1800 = vxor.u32 %v1799, 2147483648
        %v1801 = vsel %vm1718, %v1800, %v1799
        %v1802 = vsub.s32 4, %v1778
        %v1803 = vsel %vm1718, %v1802, %v1778
        %v1804 = vsel %vm1717, %v1390, %v1801
        %v1805 = vsel %vm1717, 0, %v1803
        %v1806 = vcosq.f32.pop %v1804
        %v1807 = vsinq.f32.pop %v1804
        %vm1808 = vweird.f32 %v1390
        %v1809 = vadd.s32 %v1805, 3
        %v1810 = vand.u32 %v1809, 3
        %vm1811 = vcmp.lt.s32.totalorder %v1810, 2
        %vm1812 = vcmp.eq.s32.totalorder %v1810, 0
        %v1813 = vxor.u32 %v1807, 2147483648
        %v1814 = vsel %vm1812, %v1806, %v1813
        %vm1815 = vcmp.eq.s32.totalorder %v1810, 2
        %v1816 = vxor.u32 %v1806, 2147483648
        %v1817 = vsel %vm1815, %v1816, %v1807
        %v1818 = vsel %vm1811, %v1814, %v1817
        %v1819 = vsel %vm1808, nan, %v1818
        %v1820 = vand.u32 2147483647, %v1394
        %vm1821 = vcmp.le.f32.partialorder %v1820, 0.7853982
        %vm1822 = vcmp.lt.s32.totalorder %v1394, 0
        %v1823 = vand.u32 %v1394, 2139095040
        %v1824 = vshrl.u32 %v1823, 23
        %v1825 = vsub.s32 %v1824, 127
        %v1826 = vand.u32 2147483647, %v1394
        %v1827 = vand.u32 %v1826, 8388607
        %v1828 = vor.u32 %v1827, 8388608
        %v1829 = vsub.s32 0, %v1828
        %v1830 = vadd.s32 %v1825, 1
        %vm1831 = vcmp.gt.s32.totalorder %v1830, 0
        %v1832 = vsel %vm1831, %v1830, 0
        %v1833 = vshrl.u32 %v1832, 5
        %v1834 = vand.u32 %v1832, 31
        %v1835 = vsub.s32 32, %v1834
        %v1836 = vshrl.u32 683565275, %v1835
        %v1837 = vshll.u32 683565275, %v1834
        %v1838 = vshrl.u32 2475754826, %v1835
        %v1839 = vor.u32 %v1837, %v1838
        %v1840 = vshll.u32 2475754826, %v1834
        %v1841 = vshrl.u32 2131351028, %v1835
        %v1842 = vor.u32 %v1840, %v1841
        %v1843 = vshll.u32 2131351028, %v1834
        %v1844 = vshrl.u32 2102212464, %v1835
        %v1845 = vor.u32 %v1843, %v1844
        %v1846 = vshll.u32 2102212464, %v1834
        %v1847 = vshrl.u32 920167782, %v1835
        %v1848 = vor.u32 %v1846, %v1847
        %v1849 = vshll.u32 920167782, %v1834
        %v1850 = vshrl.u32 1326507024, %v1835
        %v1851 = vor.u32 %v1849, %v1850
        %vm1852 = vcmp.lt.s32.totalorder %v1833, 1
        %vm1853 = vcmp.lt.s32.totalorder %v1833, 2
        %vm1854 = vcmp.lt.s32.totalorder %v1833, 3
        %vm1855 = vcmp.lt.s32.totalorder %v1833, 4
        %v1856 = vsel %vm1852, %v1836, %v1839
        %v1857 = vsel %vm1855, %v1845, 2102212464
        %v1858 = vsel %vm1854, %v1842, %v1857
        %v1859 = vsel %vm1853, %v1856, %v1858
        %v1860 = vsel %vm1852, %v1839, %v1842
        %v1861 = vsel %vm1855, %v1848, 920167782
        %v1862 = vsel %vm1854, %v1845, %v1861
        %v1863 = vsel %vm1853, %v1860, %v1862
        %v1864 = vsel %vm1852, %v1842, %v1845
        %v1865 = vsel %vm1855, %v1851, 1326507024
        %v1866 = vsel %vm1854, %v1848, %v1865
        %v1867 = vsel %vm1853, %v1864, %v1866
        %v1868 = vshll.u32 %v1828, 8
        %v1869 = vmul.u32.u64.compose %v1868, %v1867
        %v1870 = vextract.low.u32 %v1869
        %v1871 = vextract.high.u32 %v1869
        %v1872 = vmul.u32.u64.compose %v1868, %v1863
        %v1873 = vextract.low.u32 %v1872
        %v1874 = vextract.high.u32 %v1872
        %v1875 = vmul.u32 %v1868, %v1859
        %v1876 = vadd.s32 %v1871, %v1873
        %vm1877 = vc.u32 %v1871, %v1873
        %v1878 = vadd.s32 %v1874, 1
        %v1879 = vsel %vm1877, %v1878, %v1874
        %v1880 = vadd.s32 %v1875, %v1879
        %v1881 = vadd.s32 %v1880, 536870912
        %v1882 = vshrl.u32 %v1881, 30
        %v1883 = vshll.u32 %v1882, 30
        %v1884 = vsub.s32 %v1880, %v1883
        %vm1885 = vcmp.lt.s32.totalorder %v1884, 0
        %v1886 = vsub.s32 0, %v1884
        %v1887 = vsel %vm1885, %v1886, %v1884
        %v1888 = vclz %v1887
        %v1889 = vsub.s32 %v1888, 2
        %vm1890 = vcmp.gt.s32.totalorder 0, %v1889
        %v1891 = vsel %vm1890, 0, %v1889
        %v1892 = vsub.s32 32, %v1891
        %v1893 = vshll.u32 %v1884, %v1891
        %v1894 = vshrl.u32 %v1876, %v1892
        %v1895 = vor.u32 %v1893, %v1894
        %v1896 = vsub.s32 4294967266, %v1891
        %v1897 = vadd.s32 %v1896, 127
        %v1898 = vshll.u32 %v1897, 23
        %v1899 = vor.u32 4788187, %v1898
        %v1900 = vand.u32 2147483647, %v1899
        %v1902 = vcvt.s32.f32 %v1895
        %v1903 = vmul.f32 %v1902, %v1900
        %v1904 = vxor.u32 %v1903, 2147483648
        %v1905 = vsel %vm1822, %v1904, %v1903
        %v1906 = vsub.s32 4, %v1882
        %v1907 = vsel %vm1822, %v1906, %v1882
        %v1908 = vsel %vm1821, %v1394, %v1905
        %v1909 = vsel %vm1821, 0, %v1907
        %v1910 = vcosq.f32.pop %v1908
        %v1911 = vsinq.f32.pop %v1908
        %vm1912 = vweird.f32 %v1394
        %v1913 = vadd.s32 %v1909, 3
        %v1914 = vand.u32 %v1913, 3
        %vm1915 = vcmp.lt.s32.totalorder %v1914, 2
        %vm1916 = vcmp.eq.s32.totalorder %v1914, 0
        %v1917 = vxor.u32 %v1911, 2147483648
        %v1918 = vsel %vm1916, %v1910, %v1917
        %vm1919 = vcmp.eq.s32.totalorder %v1914, 2
        %v1920 = vxor.u32 %v1910, 2147483648
        %v1921 = vsel %vm1919, %v1920, %v1911
        %v1922 = vsel %vm1915, %v1918, %v1921
        %v1923 = vsel %vm1912, nan, %v1922
        %v1924 = vand.u32 2147483647, %v1396
        %vm1925 = vcmp.le.f32.partialorder %v1924, 0.7853982
        %vm1926 = vcmp.lt.s32.totalorder %v1396, 0
        %v1927 = vand.u32 %v1396, 2139095040
        %v1928 = vshrl.u32 %v1927, 23
        %v1929 = vsub.s32 %v1928, 127
        %v1930 = vand.u32 2147483647, %v1396
        %v1931 = vand.u32 %v1930, 8388607
        %v1932 = vor.u32 %v1931, 8388608
        %v1933 = vsub.s32 0, %v1932
        %v1934 = vadd.s32 %v1929, 1
        %vm1935 = vcmp.gt.s32.totalorder %v1934, 0
        %v1936 = vsel %vm1935, %v1934, 0
        %v1937 = vshrl.u32 %v1936, 5
        %v1938 = vand.u32 %v1936, 31
        %v1939 = vsub.s32 32, %v1938
        %v1940 = vshrl.u32 683565275, %v1939
        %v1941 = vshll.u32 683565275, %v1938
        %v1942 = vshrl.u32 2475754826, %v1939
        %v1943 = vor.u32 %v1941, %v1942
        %v1944 = vshll.u32 2475754826, %v1938
        %v1945 = vshrl.u32 2131351028, %v1939
        %v1946 = vor.u32 %v1944, %v1945
        %v1947 = vshll.u32 2131351028, %v1938
        %v1948 = vshrl.u32 2102212464, %v1939
        %v1949 = vor.u32 %v1947, %v1948
        %v1950 = vshll.u32 2102212464, %v1938
        %v1951 = vshrl.u32 920167782, %v1939
        %v1952 = vor.u32 %v1950, %v1951
        %v1953 = vshll.u32 920167782, %v1938
        %v1954 = vshrl.u32 1326507024, %v1939
        %v1955 = vor.u32 %v1953, %v1954
        %vm1956 = vcmp.lt.s32.totalorder %v1937, 1
        %vm1957 = vcmp.lt.s32.totalorder %v1937, 2
        %vm1958 = vcmp.lt.s32.totalorder %v1937, 3
        %vm1959 = vcmp.lt.s32.totalorder %v1937, 4
        %v1960 = vsel %vm1956, %v1940, %v1943
        %v1961 = vsel %vm1959, %v1949, 2102212464
        %v1962 = vsel %vm1958, %v1946, %v1961
        %v1963 = vsel %vm1957, %v1960, %v1962
        %v1964 = vsel %vm1956, %v1943, %v1946
        %v1965 = vsel %vm1959, %v1952, 920167782
        %v1966 = vsel %vm1958, %v1949, %v1965
        %v1967 = vsel %vm1957, %v1964, %v1966
        %v1968 = vsel %vm1956, %v1946, %v1949
        %v1969 = vsel %vm1959, %v1955, 1326507024
        %v1970 = vsel %vm1958, %v1952, %v1969
        %v1971 = vsel %vm1957, %v1968, %v1970
        %v1972 = vshll.u32 %v1932, 8
        %v1973 = vmul.u32.u64.compose %v1972, %v1971
        %v1974 = vextract.low.u32 %v1973
        %v1975 = vextract.high.u32 %v1973
        %v1976 = vmul.u32.u64.compose %v1972, %v1967
        %v1977 = vextract.low.u32 %v1976
        %v1978 = vextract.high.u32 %v1976
        %v1979 = vmul.u32 %v1972, %v1963
        %v1980 = vadd.s32 %v1975, %v1977
        %vm1981 = vc.u32 %v1975, %v1977
        %v1982 = vadd.s32 %v1978, 1
        %v1983 = vsel %vm1981, %v1982, %v1978
        %v1984 = vadd.s32 %v1979, %v1983
        %v1985 = vadd.s32 %v1984, 536870912
        %v1986 = vshrl.u32 %v1985, 30
        %v1987 = vshll.u32 %v1986, 30
        %v1988 = vsub.s32 %v1984, %v1987
        %vm1989 = vcmp.lt.s32.totalorder %v1988, 0
        %v1990 = vsub.s32 0, %v1988
        %v1991 = vsel %vm1989, %v1990, %v1988
        %v1992 = vclz %v1991
        %v1993 = vsub.s32 %v1992, 2
        %vm1994 = vcmp.gt.s32.totalorder 0, %v1993
        %v1995 = vsel %vm1994, 0, %v1993
        %v1996 = vsub.s32 32, %v1995
        %v1997 = vshll.u32 %v1988, %v1995
        %v1998 = vshrl.u32 %v1980, %v1996
        %v1999 = vor.u32 %v1997, %v1998
        %v2000 = vsub.s32 4294967266, %v1995
        %v2001 = vadd.s32 %v2000, 127
        %v2002 = vshll.u32 %v2001, 23
        %v2003 = vor.u32 4788187, %v2002
        %v2004 = vand.u32 2147483647, %v2003
        %v2006 = vcvt.s32.f32 %v1999
        %v2007 = vmul.f32 %v2006, %v2004
        %v2008 = vxor.u32 %v2007, 2147483648
        %v2009 = vsel %vm1926, %v2008, %v2007
        %v2010 = vsub.s32 4, %v1986
        %v2011 = vsel %vm1926, %v2010, %v1986
        %v2012 = vsel %vm1925, %v1396, %v2009
        %v2013 = vsel %vm1925, 0, %v2011
        %v2014 = vcosq.f32.pop %v2012
        %v2015 = vsinq.f32.pop %v2012
        %vm2016 = vweird.f32 %v1396
        %v2017 = vadd.s32 %v2013, 3
        %v2018 = vand.u32 %v2017, 3
        %vm2019 = vcmp.lt.s32.totalorder %v2018, 2
        %vm2020 = vcmp.eq.s32.totalorder %v2018, 0
        %v2021 = vxor.u32 %v2015, 2147483648
        %v2022 = vsel %vm2020, %v2014, %v2021
        %vm2023 = vcmp.eq.s32.totalorder %v2018, 2
        %v2024 = vxor.u32 %v2014, 2147483648
        %v2025 = vsel %vm2023, %v2024, %v2015
        %v2026 = vsel %vm2019, %v2022, %v2025
        %v2027 = vsel %vm2016, nan, %v2026
        %v2028 = vand.u32 2147483647, %v1400
        %vm2029 = vcmp.le.f32.partialorder %v2028, 0.7853982
        %vm2030 = vcmp.lt.s32.totalorder %v1400, 0
        %v2031 = vand.u32 %v1400, 2139095040
        %v2032 = vshrl.u32 %v2031, 23
        %v2033 = vsub.s32 %v2032, 127
        %v2034 = vand.u32 2147483647, %v1400
        %v2035 = vand.u32 %v2034, 8388607
        %v2036 = vor.u32 %v2035, 8388608
        %v2037 = vsub.s32 0, %v2036
        %v2038 = vadd.s32 %v2033, 1
        %vm2039 = vcmp.gt.s32.totalorder %v2038, 0
        %v2040 = vsel %vm2039, %v2038, 0
        %v2041 = vshrl.u32 %v2040, 5
        %v2042 = vand.u32 %v2040, 31
        %v2043 = vsub.s32 32, %v2042
        %v2044 = vshrl.u32 683565275, %v2043
        %v2045 = vshll.u32 683565275, %v2042
        %v2046 = vshrl.u32 2475754826, %v2043
        %v2047 = vor.u32 %v2045, %v2046
        %v2048 = vshll.u32 2475754826, %v2042
        %v2049 = vshrl.u32 2131351028, %v2043
        %v2050 = vor.u32 %v2048, %v2049
        %v2051 = vshll.u32 2131351028, %v2042
        %v2052 = vshrl.u32 2102212464, %v2043
        %v2053 = vor.u32 %v2051, %v2052
        %v2054 = vshll.u32 2102212464, %v2042
        %v2055 = vshrl.u32 920167782, %v2043
        %v2056 = vor.u32 %v2054, %v2055
        %v2057 = vshll.u32 920167782, %v2042
        %v2058 = vshrl.u32 1326507024, %v2043
        %v2059 = vor.u32 %v2057, %v2058
        %vm2060 = vcmp.lt.s32.totalorder %v2041, 1
        %vm2061 = vcmp.lt.s32.totalorder %v2041, 2
        %vm2062 = vcmp.lt.s32.totalorder %v2041, 3
        %vm2063 = vcmp.lt.s32.totalorder %v2041, 4
        %v2064 = vsel %vm2060, %v2044, %v2047
        %v2065 = vsel %vm2063, %v2053, 2102212464
        %v2066 = vsel %vm2062, %v2050, %v2065
        %v2067 = vsel %vm2061, %v2064, %v2066
        %v2068 = vsel %vm2060, %v2047, %v2050
        %v2069 = vsel %vm2063, %v2056, 920167782
        %v2070 = vsel %vm2062, %v2053, %v2069
        %v2071 = vsel %vm2061, %v2068, %v2070
        %v2072 = vsel %vm2060, %v2050, %v2053
        %v2073 = vsel %vm2063, %v2059, 1326507024
        %v2074 = vsel %vm2062, %v2056, %v2073
        %v2075 = vsel %vm2061, %v2072, %v2074
        %v2076 = vshll.u32 %v2036, 8
        %v2077 = vmul.u32.u64.compose %v2076, %v2075
        %v2078 = vextract.low.u32 %v2077
        %v2079 = vextract.high.u32 %v2077
        %v2080 = vmul.u32.u64.compose %v2076, %v2071
        %v2081 = vextract.low.u32 %v2080
        %v2082 = vextract.high.u32 %v2080
        %v2083 = vmul.u32 %v2076, %v2067
        %v2084 = vadd.s32 %v2079, %v2081
        %vm2085 = vc.u32 %v2079, %v2081
        %v2086 = vadd.s32 %v2082, 1
        %v2087 = vsel %vm2085, %v2086, %v2082
        %v2088 = vadd.s32 %v2083, %v2087
        %v2089 = vadd.s32 %v2088, 536870912
        %v2090 = vshrl.u32 %v2089, 30
        %v2091 = vshll.u32 %v2090, 30
        %v2092 = vsub.s32 %v2088, %v2091
        %vm2093 = vcmp.lt.s32.totalorder %v2092, 0
        %v2094 = vsub.s32 0, %v2092
        %v2095 = vsel %vm2093, %v2094, %v2092
        %v2096 = vclz %v2095
        %v2097 = vsub.s32 %v2096, 2
        %vm2098 = vcmp.gt.s32.totalorder 0, %v2097
        %v2099 = vsel %vm2098, 0, %v2097
        %v2100 = vsub.s32 32, %v2099
        %v2101 = vshll.u32 %v2092, %v2099
        %v2102 = vshrl.u32 %v2084, %v2100
        %v2103 = vor.u32 %v2101, %v2102
        %v2104 = vsub.s32 4294967266, %v2099
        %v2105 = vadd.s32 %v2104, 127
        %v2106 = vshll.u32 %v2105, 23
        %v2107 = vor.u32 4788187, %v2106
        %v2108 = vand.u32 2147483647, %v2107
        %v2110 = vcvt.s32.f32 %v2103
        %v2111 = vmul.f32 %v2110, %v2108
        %v2112 = vxor.u32 %v2111, 2147483648
        %v2113 = vsel %vm2030, %v2112, %v2111
        %v2114 = vsub.s32 4, %v2090
        %v2115 = vsel %vm2030, %v2114, %v2090
        %v2116 = vsel %vm2029, %v1400, %v2113
        %v2117 = vsel %vm2029, 0, %v2115
        %v2118 = vcosq.f32.pop %v2116
        %v2119 = vsinq.f32.pop %v2116
        %vm2120 = vweird.f32 %v1400
        %v2121 = vadd.s32 %v2117, 3
        %v2122 = vand.u32 %v2121, 3
        %vm2123 = vcmp.lt.s32.totalorder %v2122, 2
        %vm2124 = vcmp.eq.s32.totalorder %v2122, 0
        %v2125 = vxor.u32 %v2119, 2147483648
        %v2126 = vsel %vm2124, %v2118, %v2125
        %vm2127 = vcmp.eq.s32.totalorder %v2122, 2
        %v2128 = vxor.u32 %v2118, 2147483648
        %v2129 = vsel %vm2127, %v2128, %v2119
        %v2130 = vsel %vm2123, %v2126, %v2129
        %v2131 = vsel %vm2120, nan, %v2130
        %v2132 = vand.u32 2147483647, %v1402
        %vm2133 = vcmp.le.f32.partialorder %v2132, 0.7853982
        %vm2134 = vcmp.lt.s32.totalorder %v1402, 0
        %v2135 = vand.u32 %v1402, 2139095040
        %v2136 = vshrl.u32 %v2135, 23
        %v2137 = vsub.s32 %v2136, 127
        %v2138 = vand.u32 2147483647, %v1402
        %v2139 = vand.u32 %v2138, 8388607
        %v2140 = vor.u32 %v2139, 8388608
        %v2141 = vsub.s32 0, %v2140
        %v2142 = vadd.s32 %v2137, 1
        %vm2143 = vcmp.gt.s32.totalorder %v2142, 0
        %v2144 = vsel %vm2143, %v2142, 0
        %v2145 = vshrl.u32 %v2144, 5
        %v2146 = vand.u32 %v2144, 31
        %v2147 = vsub.s32 32, %v2146
        %v2148 = vshrl.u32 683565275, %v2147
        %v2149 = vshll.u32 683565275, %v2146
        %v2150 = vshrl.u32 2475754826, %v2147
        %v2151 = vor.u32 %v2149, %v2150
        %v2152 = vshll.u32 2475754826, %v2146
        %v2153 = vshrl.u32 2131351028, %v2147
        %v2154 = vor.u32 %v2152, %v2153
        %v2155 = vshll.u32 2131351028, %v2146
        %v2156 = vshrl.u32 2102212464, %v2147
        %v2157 = vor.u32 %v2155, %v2156
        %v2158 = vshll.u32 2102212464, %v2146
        %v2159 = vshrl.u32 920167782, %v2147
        %v2160 = vor.u32 %v2158, %v2159
        %v2161 = vshll.u32 920167782, %v2146
        %v2162 = vshrl.u32 1326507024, %v2147
        %v2163 = vor.u32 %v2161, %v2162
        %vm2164 = vcmp.lt.s32.totalorder %v2145, 1
        %vm2165 = vcmp.lt.s32.totalorder %v2145, 2
        %vm2166 = vcmp.lt.s32.totalorder %v2145, 3
        %vm2167 = vcmp.lt.s32.totalorder %v2145, 4
        %v2168 = vsel %vm2164, %v2148, %v2151
        %v2169 = vsel %vm2167, %v2157, 2102212464
        %v2170 = vsel %vm2166, %v2154, %v2169
        %v2171 = vsel %vm2165, %v2168, %v2170
        %v2172 = vsel %vm2164, %v2151, %v2154
        %v2173 = vsel %vm2167, %v2160, 920167782
        %v2174 = vsel %vm2166, %v2157, %v2173
        %v2175 = vsel %vm2165, %v2172, %v2174
        %v2176 = vsel %vm2164, %v2154, %v2157
        %v2177 = vsel %vm2167, %v2163, 1326507024
        %v2178 = vsel %vm2166, %v2160, %v2177
        %v2179 = vsel %vm2165, %v2176, %v2178
        %v2180 = vshll.u32 %v2140, 8
        %v2181 = vmul.u32.u64.compose %v2180, %v2179
        %v2182 = vextract.low.u32 %v2181
        %v2183 = vextract.high.u32 %v2181
        %v2184 = vmul.u32.u64.compose %v2180, %v2175
        %v2185 = vextract.low.u32 %v2184
        %v2186 = vextract.high.u32 %v2184
        %v2187 = vmul.u32 %v2180, %v2171
        %v2188 = vadd.s32 %v2183, %v2185
        %vm2189 = vc.u32 %v2183, %v2185
        %v2190 = vadd.s32 %v2186, 1
        %v2191 = vsel %vm2189, %v2190, %v2186
        %v2192 = vadd.s32 %v2187, %v2191
        %v2193 = vadd.s32 %v2192, 536870912
        %v2194 = vshrl.u32 %v2193, 30
        %v2195 = vshll.u32 %v2194, 30
        %v2196 = vsub.s32 %v2192, %v2195
        %vm2197 = vcmp.lt.s32.totalorder %v2196, 0
        %v2198 = vsub.s32 0, %v2196
        %v2199 = vsel %vm2197, %v2198, %v2196
        %v2200 = vclz %v2199
        %v2201 = vsub.s32 %v2200, 2
        %vm2202 = vcmp.gt.s32.totalorder 0, %v2201
        %v2203 = vsel %vm2202, 0, %v2201
        %v2204 = vsub.s32 32, %v2203
        %v2205 = vshll.u32 %v2196, %v2203
        %v2206 = vshrl.u32 %v2188, %v2204
        %v2207 = vor.u32 %v2205, %v2206
        %v2208 = vsub.s32 4294967266, %v2203
        %v2209 = vadd.s32 %v2208, 127
        %v2210 = vshll.u32 %v2209, 23
        %v2211 = vor.u32 4788187, %v2210
        %v2212 = vand.u32 2147483647, %v2211
        %v2214 = vcvt.s32.f32 %v2207
        %v2215 = vmul.f32 %v2214, %v2212
        %v2216 = vxor.u32 %v2215, 2147483648
        %v2217 = vsel %vm2134, %v2216, %v2215
        %v2218 = vsub.s32 4, %v2194
        %v2219 = vsel %vm2134, %v2218, %v2194
        %v2220 = vsel %vm2133, %v1402, %v2217
        %v2221 = vsel %vm2133, 0, %v2219
        %v2222 = vcosq.f32.pop %v2220
        %v2223 = vsinq.f32.pop %v2220
        %vm2224 = vweird.f32 %v1402
        %v2225 = vadd.s32 %v2221, 3
        %v2226 = vand.u32 %v2225, 3
        %vm2227 = vcmp.lt.s32.totalorder %v2226, 2
        %vm2228 = vcmp.eq.s32.totalorder %v2226, 0
        %v2229 = vxor.u32 %v2223, 2147483648
        %v2230 = vsel %vm2228, %v2222, %v2229
        %vm2231 = vcmp.eq.s32.totalorder %v2226, 2
        %v2232 = vxor.u32 %v2222, 2147483648
        %v2233 = vsel %vm2231, %v2232, %v2223
        %v2234 = vsel %vm2227, %v2230, %v2233
        %v2235 = vsel %vm2224, nan, %v2234
        %v2236 = vld [vmem:[%s5] sm:$0x3]
        %v2237 = vld [vmem:[%s6] sm:$0x3]
        %2239 = vset.pattern.permute.xlu0 0
        %2240 = vperm.xlu0 %2239, %v2237
        %v2241 = vpop.permute.xlu0 %2240
        %v2244 = vsel %vm381, %v2236, 0
        %2246 = vmatprep.subr.mxu0 %v1611
        %2247 = vmatpush1.msra.mxu0 %v1507
        %2248 = vmatprep.subr.mxu0 %v1819
        %2249 = vmatpush1.msra.mxu0 %v1715
        %2250 = vmatprep.subr.mxu0 %v2027
        %2251 = vmatpush1.msra.mxu0 %v1923
        %2252 = vmatprep.subr.mxu0 %v2235
        %2253 = vmatpush1.msra.mxu0 %v2131
        %2254 = vmatprep.subr.mxu0 0.0
        %2255 = vmatpush1.msra.mxu0 0.0
        %2256 = vmatprep.subr.mxu0 0.0
        %2257 = vmatpush1.msra.mxu0 0.0
        %2258 = vmatprep.subr.mxu0 0.0
        %2259 = vmatpush1.msra.mxu0 0.0
        %2260 = vmatprep.subr.mxu0 0.0
        %2261 = vmatpush1.msra.mxu0 0.0
        %2262 = vmatprep.subr.mxu0 0.0
        %2263 = vmatpush1.msra.mxu0 0.0
        %2264 = vmatprep.subr.mxu0 0.0
        %2265 = vmatpush1.msra.mxu0 0.0
        %2266 = vmatprep.subr.mxu0 0.0
        %2267 = vmatpush1.msra.mxu0 0.0
        %2268 = vmatprep.subr.mxu0 0.0
        %2269 = vmatpush1.msra.mxu0 0.0
        %2270 = vmatprep.subr.mxu0 0.0
        %2271 = vmatpush1.msra.mxu0 0.0
        %2272 = vmatprep.subr.mxu0 0.0
        %2273 = vmatpush1.msra.mxu0 0.0
        %2274 = vmatprep.subr.mxu0 0.0
        %2275 = vmatpush1.msra.mxu0 0.0
        %2276 = vmatprep.subr.mxu0 0.0
        %2277 = vmatpush1.msra.mxu0 0.0
        %2278 = vmatprep.subr.mxu0 0.0
        %2279 = vmatpush1.msra.mxu0 0.0
        %2280 = vmatprep.subr.mxu0 0.0
        %2281 = vmatpush1.msra.mxu0 0.0
        %2282 = vmatprep.subr.mxu0 0.0
        %2283 = vmatpush1.msra.mxu0 0.0
        %2284 = vmatprep.subr.mxu0 0.0
        %2285 = vmatpush1.msra.mxu0 0.0
        %2286 = vmatprep.subr.mxu0 0.0
        %2287 = vmatpush1.msra.mxu0 0.0
        %2288 = vmatprep.subr.mxu0 0.0
        %2289 = vmatpush1.msra.mxu0 0.0
        %2290 = vmatprep.subr.mxu0 0.0
        %2291 = vmatpush1.msra.mxu0 0.0
        %2292 = vmatprep.subr.mxu0 0.0
        %2293 = vmatpush1.msra.mxu0 0.0
        %2294 = vmatprep.subr.mxu0 0.0
        %2295 = vmatpush1.msra.mxu0 0.0
        %2296 = vmatprep.subr.mxu0 0.0
        %2297 = vmatpush1.msra.mxu0 0.0
        %2298 = vmatprep.subr.mxu0 0.0
        %2299 = vmatpush1.msra.mxu0 0.0
        %2300 = vmatprep.subr.mxu0 0.0
        %2301 = vmatpush1.msra.mxu0 0.0
        %2302 = vmatprep.subr.mxu0 0.0
        %2303 = vmatpush1.msra.mxu0 0.0
        %2304 = vmatprep.subr.mxu0 0.0
        %2305 = vmatpush1.msra.mxu0 0.0
        %2306 = vmatprep.subr.mxu0 0.0
        %2307 = vmatpush1.msra.mxu0 0.0
        %2308 = vmatprep.subr.mxu0 0.0
        %2309 = vmatpush1.msra.mxu0 0.0
        %2310 = vmatprep.mubr.f32.mxu0 0.0
        %2311 = vmatmul.mubr.f32.gmra.mrb[0].mxu0 %v2244
        %v2312 = vpop.f32.mrb[0].mxu0
        %v2313 = vadd.f32 %v2241, %v2312
        %v2314 = vpop.f32.mrb[0].mxu0
        %v2315 = vadd.f32 %v2241, %v2314
        %2316 = vdwg.mxu0
        %v2319 = vcombine.low %v2313, %v2315
        %v2321 = vunpack.c.l.s4 1983009808
        %v2322 = vunpack.c.0.s8 %v2321
        %v2323 = vlaneseq
        %v2324 = vshrl.u32 %v2323, 7
        %v2325 = vsub.s32 %v2322, %v2324
        %v2326 = vrot.slane %v2319, %v2325
        %2328 = vst [vmem:[%s270] sm:$0xf] %v2326
        %s2329 = sand.u32 %s181, 1
        %s2330 = scalar_lea.sflag [#allocation3], %s2329
        %s2331 = sand.u32 %s181, 1
        %s2332 = smul.addr %s2331, 4
        %s2333 = scalar_lea.vmem [#allocation2], %s2332
        // Predicated region
        $region49: #{tpu_custom_call.1} parent=47 // pred_check
          %p2334 = pneg %p191
        $region50: #{tpu_custom_call.1} parent=47 // pred_check_branch
          %2336 = sbr.rel (%p2334) target = $region52
        $region51: #{tpu_custom_call.1} parent=47 // pred_region
          %s2337 = smul.u32 2, %s21
          %s2339 = ssub.s32 64, 64
          %2340 = vsyncadd %s2330, %s2339
          %s2341 = smul.addr %s2337, 32
          %s2342 = scalar_lea.hbm %s7, %s2341
          %s2344 = sshll.u32 %s2333, 4
          %s2345 = int_to_ptr.vmem [resolvable:$true] %s2344
          %2347 = dma.vmem_to_hbm [thread:$0]  %s2345, 64, %s2342, %s2330
        $region52: #{tpu_custom_call.1} parent=47 // pred_fallthru
          _
      $region48: #{tpu_custom_call.1} parent=5 // pred_fallthru
        _
      %p2348 = scmp.le.s32.totalorder 2, %s16
      // Predicated region
      $region53: #{tpu_custom_call.1} parent=5 // pred_check
        %p2349 = pneg %p2348
      $region54: #{tpu_custom_call.1} parent=5 // pred_check_branch
        %2351 = sbr.rel (%p2349) target = $region56
      $region55: #{tpu_custom_call.1} parent=5 // pred_region
        %s2352 = ssub.s32 %s16, 2
        // Predicated region
        $region57: #{tpu_custom_call.1} parent=55 // pred_check
          %p2353 = pneg %p197
        $region58: #{tpu_custom_call.1} parent=55 // pred_check_branch
          %2355 = sbr.rel (%p2353) target = $region60
        $region59: #{tpu_custom_call.1} parent=55 // pred_region
          %s2356 = sand.u32 %s182, 1
          %s2357 = scalar_lea.sflag [#allocation3], %s2356
          %s2358 = sand.u32 %s182, 1
          %s2359 = smul.addr %s2358, 4
          %s2360 = scalar_lea.vmem [#allocation2], %s2359
          %2361 = dma.done %s2357, 64
        $region60: #{tpu_custom_call.1} parent=55 // pred_fallthru
          _
      $region56: #{tpu_custom_call.1} parent=5 // pred_fallthru
        _
    $region6: #{tpu_custom_call.1} parent=1 // loop_footer
      %s20 = sadd.s32 1, %s16
    $region7: #{tpu_custom_call.1} parent=1 // loop_footer_branch
      %15 = sbr.rel target = $region3
    $region8: #{tpu_custom_call.1} parent=1 // loop_exit
      _
    %2362 = vsyncpa [#allocation3], 1
    %s2363 = scalar_lea.sflag [#allocation3], 1
    %2364 = vsyncpa %s2363, 1

</llo_original>
